<compile_context>
chip_gen: v5e
topology: v5e:2x2
jax: 0.10.0
libtpu: 0.0.40
codegen_flags: <defaults>
</compile_context>

<pallas_src>
import functools

import jax
import jax.numpy as jnp
from jax.experimental import pallas as pl
from jax.experimental.pallas import tpu as pltpu

# Model hyperparameters (consistent with the module's __init__).
VOCAB_SIZE = 16
EMBEDDING_DIM = 8
CONTEXT_SIZE = 4
HIDDEN = 128

BATCH = 256      # number of contexts processed per call


def _round_up(x, m):
    return ((x + m - 1) // m) * m


def _device_kind():
    try:
        return jax.devices()[0].device_kind.lower()
    except Exception:
        return ""


def _pick_tile_b(batch):
    """One full-batch tile on single-TC parts; two parallel tiles on v7x (2 TCs/chip)."""
    if "v7" in _device_kind():
        return _round_up(pl.cdiv(batch, 2), 8)
    return _round_up(batch, 8)


def _pick_mhot_dtype():
    """bf16 multi-hot on v6e/v7x (native bf16 VALU); f32 compares on v5e / unknown."""
    return jnp.float32 if "v5" in _device_kind() else jnp.bfloat16


# ----------------------------------------------------------------------------- kernel


def ngram_kernel(cols_ref, wf_ref, w2_ref, b2_ref, out_ref, *, vocab_size, mhot_dtype):
    tile_b, v_pad = out_ref.shape
    cv_pad = wf_ref.shape[0]
    num_slots = cols_ref.shape[1]            # C context slots + 1 bias lane

    cols = cols_ref[...]                                  # (TILE_B, C+1) int32 flat ids
    lane = jax.lax.broadcasted_iota(jnp.int32, (tile_b, cv_pad), 1)

    # Multi-hot "gather + bias" matrix: row b has a 1 at column cols[b, c] for every
    # slot c (slot C is the always-on bias lane carrying b1 inside the fused weight).
    # Replaces per-token dynamic loads + lane-crossing concatenate + bias broadcast-add.
    mhot = jnp.zeros((tile_b, cv_pad), mhot_dtype)
    for c in range(num_slots):                            # static, small (C+1 = 5)
        mhot = mhot + (lane == cols[:, c:c + 1]).astype(mhot_dtype)

    # Fused embedding + linear1 + b1 as one MXU matmul (bf16 operands, f32 accumulation).
    h = jnp.dot(mhot.astype(jnp.bfloat16), wf_ref[...],
                preferred_element_type=jnp.float32)
    h = jnp.maximum(h, 0.0)                               # relu in f32

    # linear2 over the lane-padded vocab axis.
    logits = jnp.dot(h.astype(jnp.bfloat16), w2_ref[...],
                     preferred_element_type=jnp.float32) + b2_ref[...]

    # Mask padded vocab lanes with a large finite sentinel (robust vs -inf), then a
    # numerically-stable log_softmax entirely in f32.
    vlane = jax.lax.broadcasted_iota(jnp.int32, (tile_b, v_pad), 1)
    logits = jnp.where(vlane < vocab_size, logits, jnp.finfo(jnp.float32).min)
    m = jnp.max(logits, axis=1, keepdims=True)
    lse = jnp.log(jnp.sum(jnp.exp(logits - m), axis=1, keepdims=True)) + m
    out_ref[...] = logits - lse


# ------------------------------------------------------------------- one-time weight prep


def prepare_params(embed, w1, b1, w2, b2):
    """Hoisted out of the hot path: call once per weight update, reuse across forwards."""
    V, E = embed.shape
    CE, H = w1.shape
    C = CE // E
    cv = C * V
    cv_pad = _round_up(cv + 1, 128)     # +1 reserves the bias lane; lane-padded contraction
    v_pad = _round_up(V, 128)           # lane-dense output axis

    # Fuse embedding with linear1 per context slot:
    #   W_fused[c*V + v, :] = embed[v] @ w1[c*E:(c+1)*E, :]
    # and fold b1 into the always-on bias lane at row C*V.
    w_fused = jnp.einsum('ve,ceh->cvh', embed, w1.reshape(C, E, H)).reshape(cv, H)
    w_fused = jnp.concatenate([w_fused, b1.reshape(1, H)], axis=0)
    w_fused = jnp.pad(w_fused, ((0, cv_pad - cv - 1), (0, 0))).astype(jnp.bfloat16)

    w2_p = jnp.pad(w2, ((0, 0), (0, v_pad - V))).astype(jnp.bfloat16)
    b2_p = jnp.pad(b2.reshape(1, V), ((0, 0), (0, v_pad - V))).astype(jnp.float32)

    return {"w_fused": w_fused, "w2": w2_p, "b2": b2_p,
            "vocab_size": V, "context_size": C}


# ----------------------------------------------------------------------------- forward


@functools.partial(jax.jit, static_argnames=("vocab_size", "tile_b", "mhot_dtype"))
def _forward_impl(indices, w_fused, w2_p, b2_p, *, vocab_size, tile_b, mhot_dtype):
    B, C = indices.shape
    cv_pad, H = w_fused.shape
    v_pad = w2_p.shape[1]
    num_slots = C + 1

    # Flat fused-weight column ids (precomputed outside the kernel): slot c hits column
    # c*V + token; the extra slot is the always-on bias lane at column C*V.
    cols = indices.astype(jnp.int32) + jnp.arange(C, dtype=jnp.int32)[None, :] * vocab_size
    cols = jnp.concatenate(
        [cols, jnp.full((B, 1), C * vocab_size, dtype=jnp.int32)], axis=1)

    b_pad = _round_up(B, tile_b)
    cols = jnp.pad(cols, ((0, b_pad - B), (0, 0)))        # junk rows, sliced away below

    kernel = functools.partial(ngram_kernel, vocab_size=vocab_size, mhot_dtype=mhot_dtype)
    out = pl.pallas_call(
        kernel,
        out_shape=jax.ShapeDtypeStruct((b_pad, v_pad), jnp.float32),
        grid_spec=pltpu.PrefetchScalarGridSpec(
            num_scalar_prefetch=0,
            grid=(b_pad // tile_b,),
            in_specs=[
                pl.BlockSpec((tile_b, num_slots), lambda i: (i, 0)),  # col ids: new tile/step
                pl.BlockSpec((cv_pad, H), lambda i: (0, 0)),          # fused embed@w1 (+b1): resident
                pl.BlockSpec((H, v_pad), lambda i: (0, 0)),           # w2: resident
                pl.BlockSpec((1, v_pad), lambda i: (0, 0)),           # b2: resident
            ],
            out_specs=pl.BlockSpec((tile_b, v_pad), lambda i: (i, 0)),
        ),
        compiler_params=pltpu.CompilerParams(
            dimension_semantics=("parallel",)),   # shards tiles across v7x's two TCs
    )(cols, w_fused, w2_p, b2_p)

    return out[:B, :vocab_size]


def ngram_forward(indices, params):
    """Batched forward. indices: (B, C) int32 tokens. Returns (B, V) f32 log-probs."""
    tile_b = _pick_tile_b(indices.shape[0])
    mhot_dtype = _pick_mhot_dtype()
    return _forward_impl(indices, params["w_fused"], params["w2"], params["b2"],
                         vocab_size=params["vocab_size"], tile_b=tile_b,
                         mhot_dtype=mhot_dtype)


def reference_forward(indices, embed, w1, b1, w2, b2):
    """Pure-JAX f32 reference; row i == module forward on context i."""
    x = embed[indices].reshape(indices.shape[0], -1)      # (B, C*E)
    h = jnp.maximum(x @ w1 + b1, 0.0)
    logits = h @ w2 + b2
    return jax.nn.log_softmax(logits, axis=1)


if __name__ == "__main__":
    key = jax.random.PRNGKey(0)
    k_emb, k_w1, k_b1, k_w2, k_b2, k_idx = jax.random.split(key, 6)

    embed = jax.random.normal(k_emb, (VOCAB_SIZE, EMBEDDING_DIM), jnp.float32)
    w1 = jax.random.normal(k_w1, (CONTEXT_SIZE * EMBEDDING_DIM, HIDDEN), jnp.float32) * 0.1
    b1 = jax.random.normal(k_b1, (HIDDEN,), jnp.float32) * 0.1
    w2 = jax.random.normal(k_w2, (HIDDEN, VOCAB_SIZE), jnp.float32) * 0.1
    b2 = jax.random.normal(k_b2, (VOCAB_SIZE,), jnp.float32) * 0.1

    # A batch of context windows (each row is one module-forward's input).
    indices = jax.random.randint(k_idx, (BATCH, CONTEXT_SIZE), 0, VOCAB_SIZE, jnp.int32)

    # One-time weight prep (fuse/pad/cast) is outside the per-call hot path.
    params = jax.tree.map(jax.block_until_ready,
                          prepare_params(embed, w1, b1, w2, b2))

    log_probs = jax.block_until_ready(ngram_forward(indices, params))

    ref = reference_forward(indices, embed, w1, b1, w2, b2)
    assert log_probs.shape == (BATCH, VOCAB_SIZE)
    # Tolerance accounts for bf16 MXU operands (accumulation and epilogue are f32).
    assert jnp.allclose(log_probs, ref, atol=5e-2, rtol=5e-2)
    # Each row must still be a valid log-probability distribution.
    assert jnp.allclose(jnp.sum(jnp.exp(log_probs), axis=1), 1.0, atol=1e-3)

    print("KERNEL_OK")
</pallas_src>

<mosaic_0001>
module attributes {stable_mosaic.version = 11 : i64} {
  func.func @ngram_kernel(%arg0: i32, %arg1: memref<256x5xi32, #tpu.memory_space<vmem>>, %arg2: memref<128x128xbf16, #tpu.memory_space<vmem>>, %arg3: memref<128x128xbf16, #tpu.memory_space<vmem>>, %arg4: memref<1x128xf32, #tpu.memory_space<vmem>>, %arg5: memref<256x128xf32, #tpu.memory_space<vmem>>) attributes {dimension_semantics = [#tpu.dimension_semantics<parallel>], iteration_bounds = array<i64: 1>, scalar_prefetch = 0 : i64, scratch_operands = 0 : i64, tpu.core_type = #tpu.core_type<tc>, window_params = [{transform_indices = @transform_0, window_bounds = array<i64: 256, 5>}, {pipeline_mode = #tpu.pipeline_mode<synchronous>, transform_indices = @transform_1, window_bounds = array<i64: 128, 128>}, {pipeline_mode = #tpu.pipeline_mode<synchronous>, transform_indices = @transform_2, window_bounds = array<i64: 128, 128>}, {pipeline_mode = #tpu.pipeline_mode<synchronous>, transform_indices = @transform_3, window_bounds = array<i64: 1, 128>}, {transform_indices = @transform_4, window_bounds = array<i64: 256, 128>}]} {
    %c0 = arith.constant 0 : index
    %c0_0 = arith.constant 0 : index
    %0 = vector.load %arg1[%c0, %c0_0] : memref<256x5xi32, #tpu.memory_space<vmem>>, vector<256x5xi32>
    %1 = tpu.iota {dimensions = array<i32: 1>} : vector<256x128xi32>
    %cst = arith.constant 0.000000e+00 : bf16
    %2 = vector.broadcast %cst : bf16 to vector<256x128xbf16>
    %3 = vector.extract_strided_slice %0 {offsets = [0, 0], sizes = [256, 1], strides = [1, 1]} : vector<256x5xi32> to vector<256x1xi32>
    %4 = vector.broadcast %3 : vector<256x1xi32> to vector<256x128xi32>
    %5 = arith.cmpi eq, %1, %4 : vector<256x128xi32>
    %6 = arith.extui %5 : vector<256x128xi1> to vector<256x128xi32>
    %7 = arith.sitofp %6 : vector<256x128xi32> to vector<256x128xf32>
    %8 = arith.truncf %7 : vector<256x128xf32> to vector<256x128xbf16>
    %9 = arith.addf %2, %8 : vector<256x128xbf16>
    %10 = vector.extract_strided_slice %0 {offsets = [0, 1], sizes = [256, 1], strides = [1, 1]} : vector<256x5xi32> to vector<256x1xi32>
    %11 = vector.broadcast %10 : vector<256x1xi32> to vector<256x128xi32>
    %12 = arith.cmpi eq, %1, %11 : vector<256x128xi32>
    %13 = arith.extui %12 : vector<256x128xi1> to vector<256x128xi32>
    %14 = arith.sitofp %13 : vector<256x128xi32> to vector<256x128xf32>
    %15 = arith.truncf %14 : vector<256x128xf32> to vector<256x128xbf16>
    %16 = arith.addf %9, %15 : vector<256x128xbf16>
    %17 = vector.extract_strided_slice %0 {offsets = [0, 2], sizes = [256, 1], strides = [1, 1]} : vector<256x5xi32> to vector<256x1xi32>
    %18 = vector.broadcast %17 : vector<256x1xi32> to vector<256x128xi32>
    %19 = arith.cmpi eq, %1, %18 : vector<256x128xi32>
    %20 = arith.extui %19 : vector<256x128xi1> to vector<256x128xi32>
    %21 = arith.sitofp %20 : vector<256x128xi32> to vector<256x128xf32>
    %22 = arith.truncf %21 : vector<256x128xf32> to vector<256x128xbf16>
    %23 = arith.addf %16, %22 : vector<256x128xbf16>
    %24 = vector.extract_strided_slice %0 {offsets = [0, 3], sizes = [256, 1], strides = [1, 1]} : vector<256x5xi32> to vector<256x1xi32>
    %25 = vector.broadcast %24 : vector<256x1xi32> to vector<256x128xi32>
    %26 = arith.cmpi eq, %1, %25 : vector<256x128xi32>
    %27 = arith.extui %26 : vector<256x128xi1> to vector<256x128xi32>
    %28 = arith.sitofp %27 : vector<256x128xi32> to vector<256x128xf32>
    %29 = arith.truncf %28 : vector<256x128xf32> to vector<256x128xbf16>
    %30 = arith.addf %23, %29 : vector<256x128xbf16>
    %31 = vector.extract_strided_slice %0 {offsets = [0, 4], sizes = [256, 1], strides = [1, 1]} : vector<256x5xi32> to vector<256x1xi32>
    %32 = vector.broadcast %31 : vector<256x1xi32> to vector<256x128xi32>
    %33 = arith.cmpi eq, %1, %32 : vector<256x128xi32>
    %34 = arith.extui %33 : vector<256x128xi1> to vector<256x128xi32>
    %35 = arith.sitofp %34 : vector<256x128xi32> to vector<256x128xf32>
    %36 = arith.truncf %35 : vector<256x128xf32> to vector<256x128xbf16>
    %37 = arith.addf %30, %36 : vector<256x128xbf16>
    %c0_1 = arith.constant 0 : index
    %c0_2 = arith.constant 0 : index
    %38 = vector.load %arg2[%c0_1, %c0_2] : memref<128x128xbf16, #tpu.memory_space<vmem>>, vector<128x128xbf16>
    %cst_3 = arith.constant dense<0.000000e+00> : vector<256x128xf32>
    %39 = tpu.matmul %37, %38, %cst_3 {dimension_numbers = #tpu.dot_dimension_numbers<[1], [0], [0], [1], [0, 0, 1, 1], [], []>} : vector<256x128xbf16>, vector<128x128xbf16>, vector<256x128xf32> -> vector<256x128xf32>
    %cst_4 = arith.constant 0.000000e+00 : f32
    %40 = vector.broadcast %cst_4 : f32 to vector<256x128xf32>
    %41 = arith.maximumf %39, %40 : vector<256x128xf32>
    %42 = arith.truncf %41 : vector<256x128xf32> to vector<256x128xbf16>
    %c0_5 = arith.constant 0 : index
    %c0_6 = arith.constant 0 : index
    %43 = vector.load %arg3[%c0_5, %c0_6] : memref<128x128xbf16, #tpu.memory_space<vmem>>, vector<128x128xbf16>
    %cst_7 = arith.constant dense<0.000000e+00> : vector<256x128xf32>
    %44 = tpu.matmul %42, %43, %cst_7 {dimension_numbers = #tpu.dot_dimension_numbers<[1], [0], [0], [1], [0, 0, 1, 1], [], []>} : vector<256x128xbf16>, vector<128x128xbf16>, vector<256x128xf32> -> vector<256x128xf32>
    %c0_8 = arith.constant 0 : index
    %c0_9 = arith.constant 0 : index
    %45 = vector.load %arg4[%c0_8, %c0_9] : memref<1x128xf32, #tpu.memory_space<vmem>>, vector<1x128xf32>
    %46 = vector.broadcast %45 : vector<1x128xf32> to vector<256x128xf32>
    %47 = arith.addf %44, %46 : vector<256x128xf32>
    %48 = tpu.iota {dimensions = array<i32: 1>} : vector<256x128xi32>
    %c16_i32 = arith.constant 16 : i32
    %49 = vector.broadcast %c16_i32 : i32 to vector<256x128xi32>
    %50 = arith.cmpi slt, %48, %49 : vector<256x128xi32>
    %cst_10 = arith.constant -3.40282347E+38 : f32
    %51 = vector.broadcast %cst_10 : f32 to vector<256x128xf32>
    %52 = arith.select %50, %47, %51 : vector<256x128xi1>, vector<256x128xf32>
    %cst_11 = arith.constant dense<0xFF800000> : vector<256xf32>
    %53 = vector.multi_reduction <maximumf>, %52, %cst_11 [1] : vector<256x128xf32> to vector<256xf32>
    %54 = vector.shape_cast %53 : vector<256xf32> to vector<256x1xf32>
    %55 = vector.broadcast %54 : vector<256x1xf32> to vector<256x128xf32>
    %56 = arith.subf %52, %55 : vector<256x128xf32>
    %57 = math.exp %56 : vector<256x128xf32>
    %cst_12 = arith.constant dense<0.000000e+00> : vector<256xf32>
    %58 = vector.multi_reduction <add>, %57, %cst_12 [1] : vector<256x128xf32> to vector<256xf32>
    %59 = vector.shape_cast %58 : vector<256xf32> to vector<256x1xf32>
    %60 = math.log %59 : vector<256x1xf32>
    %61 = arith.addf %60, %54 : vector<256x1xf32>
    %62 = vector.broadcast %61 : vector<256x1xf32> to vector<256x128xf32>
    %63 = arith.subf %52, %62 : vector<256x128xf32>
    %c0_13 = arith.constant 0 : index
    %c0_14 = arith.constant 0 : index
    %64 = vector.load %arg5[%c0_13, %c0_14] : memref<256x128xf32, #tpu.memory_space<vmem>>, vector<256x128xf32>
    tpu.vector_store %arg5[%c0_13, %c0_14], %63 {strides = array<i32>} : memref<256x128xf32, #tpu.memory_space<vmem>>, vector<256x128xf32>,
    return
  }
  func.func @transform_0(%arg0: i32) -> (i32, i32) {
    %c0_i32 = arith.constant 0 : i32
    %c0_i32_0 = arith.constant 0 : i32
    return %arg0, %c0_i32 : i32, i32
  }
  func.func @transform_1(%arg0: i32) -> (i32, i32) {
    %c0_i32 = arith.constant 0 : i32
    %c0_i32_0 = arith.constant 0 : i32
    %c0_i32_1 = arith.constant 0 : i32
    return %c0_i32, %c0_i32_0 : i32, i32
  }
  func.func @transform_2(%arg0: i32) -> (i32, i32) {
    %c0_i32 = arith.constant 0 : i32
    %c0_i32_0 = arith.constant 0 : i32
    %c0_i32_1 = arith.constant 0 : i32
    return %c0_i32, %c0_i32_0 : i32, i32
  }
  func.func @transform_3(%arg0: i32) -> (i32, i32) {
    %c0_i32 = arith.constant 0 : i32
    %c0_i32_0 = arith.constant 0 : i32
    %c0_i32_1 = arith.constant 0 : i32
    return %c0_i32, %c0_i32_0 : i32, i32
  }
  func.func @transform_4(%arg0: i32) -> (i32, i32) {
    %c0_i32 = arith.constant 0 : i32
    %c0_i32_0 = arith.constant 0 : i32
    return %arg0, %c0_i32 : i32, i32
  }
}

</mosaic_0001>

<llo_original>
// kernel: _forward_impl.1
$region0: #{_forward_impl.1}
  #allocation0 [shape = 'u32[]', space=smem, size = 0x4, offset = 0x4, fixed_abs, tag = 'smem constant byte address 0x4 - core index']
  #allocation1 [shape = 'u32[72,128]{1,0:T(1,128)}', space=vmem, size = 0x9000, scoped, tag = 'internal scratch']
  %s0 = inlined_call_operand.vmem [shape: s32[256,5], index: 0, kind: input, shape index: {}]
  %s1 = inlined_call_operand.vmem [shape: bf16[128,128], index: 1, kind: input, shape index: {}]
  %s2 = inlined_call_operand.vmem [shape: bf16[128,128], index: 2, kind: input, shape index: {}]
  %s3 = inlined_call_operand.vmem [shape: f32[1,128], index: 3, kind: input, shape index: {}]
  %s4 = inlined_call_operand.vmem [shape: f32[256,128], index: 4, kind: output, shape index: {}]
  %s5 = sld [smem:[#allocation0]]
  $region26: #{_forward_impl.1} parent=0
    _
  %s7 = ssub.s32 1, %s5
  %s8 = scalar_select 0, %s7, %s5
  // Predicated region
  $region2: #{_forward_impl.1} parent=0 // pred_check
    _
  $region3: #{_forward_impl.1} parent=0 // pred_check_branch
    %10 = sbr.rel (0) target = $region5
  $region4: #{_forward_impl.1} parent=0 // pred_region
    _
  $region5: #{_forward_impl.1} parent=0 // pred_fallthru
    _
  // Predicated region
  $region6: #{_forward_impl.1} parent=0 // pred_check
    _
  $region7: #{_forward_impl.1} parent=0 // pred_check_branch
    %12 = sbr.rel (0) target = $region9
  $region8: #{_forward_impl.1} parent=0 // pred_region
    _
  $region9: #{_forward_impl.1} parent=0 // pred_fallthru
    _
  // Predicated region
  $region10: #{_forward_impl.1} parent=0 // pred_check
    _
  $region11: #{_forward_impl.1} parent=0 // pred_check_branch
    %14 = sbr.rel (0) target = $region13
  $region12: #{_forward_impl.1} parent=0 // pred_region
    _
  $region13: #{_forward_impl.1} parent=0 // pred_fallthru
    _
  // Predicated region
  $region14: #{_forward_impl.1} parent=0 // pred_check
    _
  $region15: #{_forward_impl.1} parent=0 // pred_check_branch
    %16 = sbr.rel (0) target = $region17
  $region16: #{_forward_impl.1} parent=0 // pred_region
    _
  $region17: #{_forward_impl.1} parent=0 // pred_fallthru
    _
  %v17 = vld [vmem:[%s0] sm:$0xff]
  %v18 = vld [vmem:[%s0 + $0x8] sm:$0xff]
  %v19 = vld [vmem:[%s0 + $0x10] sm:$0xff]
  %v20 = vld [vmem:[%s0 + $0x18] sm:$0xff]
  %v21 = vld [vmem:[%s0 + $0x20] sm:$0xff]
  %v22 = vld [vmem:[%s0 + $0x28] sm:$0xff]
  %v23 = vld [vmem:[%s0 + $0x30] sm:$0xff]
  %v24 = vld [vmem:[%s0 + $0x38] sm:$0xff]
  %v25 = vld [vmem:[%s0 + $0x40] sm:$0xff]
  %v26 = vld [vmem:[%s0 + $0x48] sm:$0xff]
  %v27 = vld [vmem:[%s0 + $0x50] sm:$0xff]
  %v28 = vld [vmem:[%s0 + $0x58] sm:$0xff]
  %v29 = vld [vmem:[%s0 + $0x60] sm:$0xff]
  %v30 = vld [vmem:[%s0 + $0x68] sm:$0xff]
  %v31 = vld [vmem:[%s0 + $0x70] sm:$0xff]
  %v32 = vld [vmem:[%s0 + $0x78] sm:$0xff]
  %v33 = vld [vmem:[%s0 + $0x80] sm:$0xff]
  %v34 = vld [vmem:[%s0 + $0x88] sm:$0xff]
  %v35 = vld [vmem:[%s0 + $0x90] sm:$0xff]
  %v36 = vld [vmem:[%s0 + $0x98] sm:$0xff]
  %v37 = vld [vmem:[%s0 + $0xa0] sm:$0xff]
  %v38 = vld [vmem:[%s0 + $0xa8] sm:$0xff]
  %v39 = vld [vmem:[%s0 + $0xb0] sm:$0xff]
  %v40 = vld [vmem:[%s0 + $0xb8] sm:$0xff]
  %v41 = vld [vmem:[%s0 + $0xc0] sm:$0xff]
  %v42 = vld [vmem:[%s0 + $0xc8] sm:$0xff]
  %v43 = vld [vmem:[%s0 + $0xd0] sm:$0xff]
  %v44 = vld [vmem:[%s0 + $0xd8] sm:$0xff]
  %v45 = vld [vmem:[%s0 + $0xe0] sm:$0xff]
  %v46 = vld [vmem:[%s0 + $0xe8] sm:$0xff]
  %v47 = vld [vmem:[%s0 + $0xf0] sm:$0xff]
  %v48 = vld [vmem:[%s0 + $0xf8] sm:$0xff]
  %v49 = vlaneseq
  %v50 = vand.u32 %v49, 127
  %51 = vset.pattern.permute.xlu0 0
  %52 = vperm.xlu0 %51, %v17
  %v53 = vpop.permute.xlu0 %52
  %54 = vset.pattern.permute.xlu0 0
  %55 = vperm.xlu0 %54, %v18
  %v56 = vpop.permute.xlu0 %55
  %57 = vset.pattern.permute.xlu0 0
  %58 = vperm.xlu0 %57, %v19
  %v59 = vpop.permute.xlu0 %58
  %60 = vset.pattern.permute.xlu0 0
  %61 = vperm.xlu0 %60, %v20
  %v62 = vpop.permute.xlu0 %61
  %63 = vset.pattern.permute.xlu0 0
  %64 = vperm.xlu0 %63, %v21
  %v65 = vpop.permute.xlu0 %64
  %66 = vset.pattern.permute.xlu0 0
  %67 = vperm.xlu0 %66, %v22
  %v68 = vpop.permute.xlu0 %67
  %69 = vset.pattern.permute.xlu0 0
  %70 = vperm.xlu0 %69, %v23
  %v71 = vpop.permute.xlu0 %70
  %72 = vset.pattern.permute.xlu0 0
  %73 = vperm.xlu0 %72, %v24
  %v74 = vpop.permute.xlu0 %73
  %75 = vset.pattern.permute.xlu0 0
  %76 = vperm.xlu0 %75, %v25
  %v77 = vpop.permute.xlu0 %76
  %78 = vset.pattern.permute.xlu0 0
  %79 = vperm.xlu0 %78, %v26
  %v80 = vpop.permute.xlu0 %79
  %81 = vset.pattern.permute.xlu0 0
  %82 = vperm.xlu0 %81, %v27
  %v83 = vpop.permute.xlu0 %82
  %84 = vset.pattern.permute.xlu0 0
  %85 = vperm.xlu0 %84, %v28
  %v86 = vpop.permute.xlu0 %85
  %87 = vset.pattern.permute.xlu0 0
  %88 = vperm.xlu0 %87, %v29
  %v89 = vpop.permute.xlu0 %88
  %90 = vset.pattern.permute.xlu0 0
  %91 = vperm.xlu0 %90, %v30
  %v92 = vpop.permute.xlu0 %91
  %93 = vset.pattern.permute.xlu0 0
  %94 = vperm.xlu0 %93, %v31
  %v95 = vpop.permute.xlu0 %94
  %96 = vset.pattern.permute.xlu0 0
  %97 = vperm.xlu0 %96, %v32
  %v98 = vpop.permute.xlu0 %97
  %99 = vset.pattern.permute.xlu0 0
  %100 = vperm.xlu0 %99, %v33
  %v101 = vpop.permute.xlu0 %100
  %102 = vset.pattern.permute.xlu0 0
  %103 = vperm.xlu0 %102, %v34
  %v104 = vpop.permute.xlu0 %103
  %105 = vset.pattern.permute.xlu0 0
  %106 = vperm.xlu0 %105, %v35
  %v107 = vpop.permute.xlu0 %106
  %108 = vset.pattern.permute.xlu0 0
  %109 = vperm.xlu0 %108, %v36
  %v110 = vpop.permute.xlu0 %109
  %111 = vset.pattern.permute.xlu0 0
  %112 = vperm.xlu0 %111, %v37
  %v113 = vpop.permute.xlu0 %112
  %114 = vset.pattern.permute.xlu0 0
  %115 = vperm.xlu0 %114, %v38
  %v116 = vpop.permute.xlu0 %115
  %117 = vset.pattern.permute.xlu0 0
  %118 = vperm.xlu0 %117, %v39
  %v119 = vpop.permute.xlu0 %118
  %120 = vset.pattern.permute.xlu0 0
  %121 = vperm.xlu0 %120, %v40
  %v122 = vpop.permute.xlu0 %121
  %123 = vset.pattern.permute.xlu0 0
  %124 = vperm.xlu0 %123, %v41
  %v125 = vpop.permute.xlu0 %124
  %126 = vset.pattern.permute.xlu0 0
  %127 = vperm.xlu0 %126, %v42
  %v128 = vpop.permute.xlu0 %127
  %129 = vset.pattern.permute.xlu0 0
  %130 = vperm.xlu0 %129, %v43
  %v131 = vpop.permute.xlu0 %130
  %132 = vset.pattern.permute.xlu0 0
  %133 = vperm.xlu0 %132, %v44
  %v134 = vpop.permute.xlu0 %133
  %135 = vset.pattern.permute.xlu0 0
  %136 = vperm.xlu0 %135, %v45
  %v137 = vpop.permute.xlu0 %136
  %138 = vset.pattern.permute.xlu0 0
  %139 = vperm.xlu0 %138, %v46
  %v140 = vpop.permute.xlu0 %139
  %141 = vset.pattern.permute.xlu0 0
  %142 = vperm.xlu0 %141, %v47
  %v143 = vpop.permute.xlu0 %142
  %144 = vset.pattern.permute.xlu0 0
  %145 = vperm.xlu0 %144, %v48
  %v146 = vpop.permute.xlu0 %145
  %vm147 = vcmp.eq.s32.totalorder %v50, %v53
  %vm148 = vcmp.eq.s32.totalorder %v50, %v56
  %vm149 = vcmp.eq.s32.totalorder %v50, %v59
  %vm150 = vcmp.eq.s32.totalorder %v50, %v62
  %vm151 = vcmp.eq.s32.totalorder %v50, %v65
  %vm152 = vcmp.eq.s32.totalorder %v50, %v68
  %vm153 = vcmp.eq.s32.totalorder %v50, %v71
  %vm154 = vcmp.eq.s32.totalorder %v50, %v74
  %vm155 = vcmp.eq.s32.totalorder %v50, %v77
  %vm156 = vcmp.eq.s32.totalorder %v50, %v80
  %vm157 = vcmp.eq.s32.totalorder %v50, %v83
  %vm158 = vcmp.eq.s32.totalorder %v50, %v86
  %vm159 = vcmp.eq.s32.totalorder %v50, %v89
  %vm160 = vcmp.eq.s32.totalorder %v50, %v92
  %vm161 = vcmp.eq.s32.totalorder %v50, %v95
  %vm162 = vcmp.eq.s32.totalorder %v50, %v98
  %vm163 = vcmp.eq.s32.totalorder %v50, %v101
  %vm164 = vcmp.eq.s32.totalorder %v50, %v104
  %vm165 = vcmp.eq.s32.totalorder %v50, %v107
  %vm166 = vcmp.eq.s32.totalorder %v50, %v110
  %vm167 = vcmp.eq.s32.totalorder %v50, %v113
  %vm168 = vcmp.eq.s32.totalorder %v50, %v116
  %vm169 = vcmp.eq.s32.totalorder %v50, %v119
  %vm170 = vcmp.eq.s32.totalorder %v50, %v122
  %vm171 = vcmp.eq.s32.totalorder %v50, %v125
  %vm172 = vcmp.eq.s32.totalorder %v50, %v128
  %vm173 = vcmp.eq.s32.totalorder %v50, %v131
  %vm174 = vcmp.eq.s32.totalorder %v50, %v134
  %vm175 = vcmp.eq.s32.totalorder %v50, %v137
  %vm176 = vcmp.eq.s32.totalorder %v50, %v140
  %vm177 = vcmp.eq.s32.totalorder %v50, %v143
  %vm178 = vcmp.eq.s32.totalorder %v50, %v146
  %v179 = vsel %vm147, 1, 0
  %v180 = vsel %vm148, 1, 0
  %v181 = vsel %vm149, 1, 0
  %v182 = vsel %vm150, 1, 0
  %v183 = vsel %vm151, 1, 0
  %v184 = vsel %vm152, 1, 0
  %v185 = vsel %vm153, 1, 0
  %v186 = vsel %vm154, 1, 0
  %v187 = vsel %vm155, 1, 0
  %v188 = vsel %vm156, 1, 0
  %v189 = vsel %vm157, 1, 0
  %v190 = vsel %vm158, 1, 0
  %v191 = vsel %vm159, 1, 0
  %v192 = vsel %vm160, 1, 0
  %v193 = vsel %vm161, 1, 0
  %v194 = vsel %vm162, 1, 0
  %v195 = vsel %vm163, 1, 0
  %v196 = vsel %vm164, 1, 0
  %v197 = vsel %vm165, 1, 0
  %v198 = vsel %vm166, 1, 0
  %v199 = vsel %vm167, 1, 0
  %v200 = vsel %vm168, 1, 0
  %v201 = vsel %vm169, 1, 0
  %v202 = vsel %vm170, 1, 0
  %v203 = vsel %vm171, 1, 0
  %v204 = vsel %vm172, 1, 0
  %v205 = vsel %vm173, 1, 0
  %v206 = vsel %vm174, 1, 0
  %v207 = vsel %vm175, 1, 0
  %v208 = vsel %vm176, 1, 0
  %v209 = vsel %vm177, 1, 0
  %v210 = vsel %vm178, 1, 0
  %v211 = vcvt.s32.f32 %v179
  %v212 = vcvt.s32.f32 %v180
  %v213 = vcvt.s32.f32 %v181
  %v214 = vcvt.s32.f32 %v182
  %v215 = vcvt.s32.f32 %v183
  %v216 = vcvt.s32.f32 %v184
  %v217 = vcvt.s32.f32 %v185
  %v218 = vcvt.s32.f32 %v186
  %v219 = vcvt.s32.f32 %v187
  %v220 = vcvt.s32.f32 %v188
  %v221 = vcvt.s32.f32 %v189
  %v222 = vcvt.s32.f32 %v190
  %v223 = vcvt.s32.f32 %v191
  %v224 = vcvt.s32.f32 %v192
  %v225 = vcvt.s32.f32 %v193
  %v226 = vcvt.s32.f32 %v194
  %v227 = vcvt.s32.f32 %v195
  %v228 = vcvt.s32.f32 %v196
  %v229 = vcvt.s32.f32 %v197
  %v230 = vcvt.s32.f32 %v198
  %v231 = vcvt.s32.f32 %v199
  %v232 = vcvt.s32.f32 %v200
  %v233 = vcvt.s32.f32 %v201
  %v234 = vcvt.s32.f32 %v202
  %v235 = vcvt.s32.f32 %v203
  %v236 = vcvt.s32.f32 %v204
  %v237 = vcvt.s32.f32 %v205
  %v238 = vcvt.s32.f32 %v206
  %v239 = vcvt.s32.f32 %v207
  %v240 = vcvt.s32.f32 %v208
  %v241 = vcvt.s32.f32 %v209
  %v242 = vcvt.s32.f32 %v210
  %v243 = vpack.c.bf16 %v211, %v211
  %v244 = vpack.c.bf16 %v212, %v212
  %v245 = vpack.c.bf16 %v213, %v213
  %v246 = vpack.c.bf16 %v214, %v214
  %v247 = vpack.c.bf16 %v215, %v215
  %v248 = vpack.c.bf16 %v216, %v216
  %v249 = vpack.c.bf16 %v217, %v217
  %v250 = vpack.c.bf16 %v218, %v218
  %v251 = vpack.c.bf16 %v219, %v219
  %v252 = vpack.c.bf16 %v220, %v220
  %v253 = vpack.c.bf16 %v221, %v221
  %v254 = vpack.c.bf16 %v222, %v222
  %v255 = vpack.c.bf16 %v223, %v223
  %v256 = vpack.c.bf16 %v224, %v224
  %v257 = vpack.c.bf16 %v225, %v225
  %v258 = vpack.c.bf16 %v226, %v226
  %v259 = vpack.c.bf16 %v227, %v227
  %v260 = vpack.c.bf16 %v228, %v228
  %v261 = vpack.c.bf16 %v229, %v229
  %v262 = vpack.c.bf16 %v230, %v230
  %v263 = vpack.c.bf16 %v231, %v231
  %v264 = vpack.c.bf16 %v232, %v232
  %v265 = vpack.c.bf16 %v233, %v233
  %v266 = vpack.c.bf16 %v234, %v234
  %v267 = vpack.c.bf16 %v235, %v235
  %v268 = vpack.c.bf16 %v236, %v236
  %v269 = vpack.c.bf16 %v237, %v237
  %v270 = vpack.c.bf16 %v238, %v238
  %v271 = vpack.c.bf16 %v239, %v239
  %v272 = vpack.c.bf16 %v240, %v240
  %v273 = vpack.c.bf16 %v241, %v241
  %v274 = vpack.c.bf16 %v242, %v242
  %v275 = vunpack.c.l.bf16 %v243
  %v276 = vunpack.c.l.bf16 %v244
  %v277 = vunpack.c.l.bf16 %v245
  %v278 = vunpack.c.l.bf16 %v246
  %v279 = vunpack.c.l.bf16 %v247
  %v280 = vunpack.c.l.bf16 %v248
  %v281 = vunpack.c.l.bf16 %v249
  %v282 = vunpack.c.l.bf16 %v250
  %v283 = vunpack.c.l.bf16 %v251
  %v284 = vunpack.c.l.bf16 %v252
  %v285 = vunpack.c.l.bf16 %v253
  %v286 = vunpack.c.l.bf16 %v254
  %v287 = vunpack.c.l.bf16 %v255
  %v288 = vunpack.c.l.bf16 %v256
  %v289 = vunpack.c.l.bf16 %v257
  %v290 = vunpack.c.l.bf16 %v258
  %v291 = vunpack.c.l.bf16 %v259
  %v292 = vunpack.c.l.bf16 %v260
  %v293 = vunpack.c.l.bf16 %v261
  %v294 = vunpack.c.l.bf16 %v262
  %v295 = vunpack.c.l.bf16 %v263
  %v296 = vunpack.c.l.bf16 %v264
  %v297 = vunpack.c.l.bf16 %v265
  %v298 = vunpack.c.l.bf16 %v266
  %v299 = vunpack.c.l.bf16 %v267
  %v300 = vunpack.c.l.bf16 %v268
  %v301 = vunpack.c.l.bf16 %v269
  %v302 = vunpack.c.l.bf16 %v270
  %v303 = vunpack.c.l.bf16 %v271
  %v304 = vunpack.c.l.bf16 %v272
  %v305 = vunpack.c.l.bf16 %v273
  %v306 = vunpack.c.l.bf16 %v274
  %v307 = vadd.f32 %v275, 0.0
  %v308 = vadd.f32 %v276, 0.0
  %v309 = vadd.f32 %v277, 0.0
  %v310 = vadd.f32 %v278, 0.0
  %v311 = vadd.f32 %v279, 0.0
  %v312 = vadd.f32 %v280, 0.0
  %v313 = vadd.f32 %v281, 0.0
  %v314 = vadd.f32 %v282, 0.0
  %v315 = vadd.f32 %v283, 0.0
  %v316 = vadd.f32 %v284, 0.0
  %v317 = vadd.f32 %v285, 0.0
  %v318 = vadd.f32 %v286, 0.0
  %v319 = vadd.f32 %v287, 0.0
  %v320 = vadd.f32 %v288, 0.0
  %v321 = vadd.f32 %v289, 0.0
  %v322 = vadd.f32 %v290, 0.0
  %v323 = vadd.f32 %v291, 0.0
  %v324 = vadd.f32 %v292, 0.0
  %v325 = vadd.f32 %v293, 0.0
  %v326 = vadd.f32 %v294, 0.0
  %v327 = vadd.f32 %v295, 0.0
  %v328 = vadd.f32 %v296, 0.0
  %v329 = vadd.f32 %v297, 0.0
  %v330 = vadd.f32 %v298, 0.0
  %v331 = vadd.f32 %v299, 0.0
  %v332 = vadd.f32 %v300, 0.0
  %v333 = vadd.f32 %v301, 0.0
  %v334 = vadd.f32 %v302, 0.0
  %v335 = vadd.f32 %v303, 0.0
  %v336 = vadd.f32 %v304, 0.0
  %v337 = vadd.f32 %v305, 0.0
  %v338 = vadd.f32 %v306, 0.0
  %v339 = vpack.c.bf16 %v307, %v307
  %v340 = vpack.c.bf16 %v308, %v308
  %v341 = vpack.c.bf16 %v309, %v309
  %v342 = vpack.c.bf16 %v310, %v310
  %v343 = vpack.c.bf16 %v311, %v311
  %v344 = vpack.c.bf16 %v312, %v312
  %v345 = vpack.c.bf16 %v313, %v313
  %v346 = vpack.c.bf16 %v314, %v314
  %v347 = vpack.c.bf16 %v315, %v315
  %v348 = vpack.c.bf16 %v316, %v316
  %v349 = vpack.c.bf16 %v317, %v317
  %v350 = vpack.c.bf16 %v318, %v318
  %v351 = vpack.c.bf16 %v319, %v319
  %v352 = vpack.c.bf16 %v320, %v320
  %v353 = vpack.c.bf16 %v321, %v321
  %v354 = vpack.c.bf16 %v322, %v322
  %v355 = vpack.c.bf16 %v323, %v323
  %v356 = vpack.c.bf16 %v324, %v324
  %v357 = vpack.c.bf16 %v325, %v325
  %v358 = vpack.c.bf16 %v326, %v326
  %v359 = vpack.c.bf16 %v327, %v327
  %v360 = vpack.c.bf16 %v328, %v328
  %v361 = vpack.c.bf16 %v329, %v329
  %v362 = vpack.c.bf16 %v330, %v330
  %v363 = vpack.c.bf16 %v331, %v331
  %v364 = vpack.c.bf16 %v332, %v332
  %v365 = vpack.c.bf16 %v333, %v333
  %v366 = vpack.c.bf16 %v334, %v334
  %v367 = vpack.c.bf16 %v335, %v335
  %v368 = vpack.c.bf16 %v336, %v336
  %v369 = vpack.c.bf16 %v337, %v337
  %v370 = vpack.c.bf16 %v338, %v338
  %371 = vset.pattern.permute.xlu0 1
  %372 = vperm.xlu0 %371, %v17
  %v373 = vpop.permute.xlu0 %372
  %374 = vset.pattern.permute.xlu0 1
  %375 = vperm.xlu0 %374, %v18
  %v376 = vpop.permute.xlu0 %375
  %377 = vset.pattern.permute.xlu0 1
  %378 = vperm.xlu0 %377, %v19
  %v379 = vpop.permute.xlu0 %378
  %380 = vset.pattern.permute.xlu0 1
  %381 = vperm.xlu0 %380, %v20
  %v382 = vpop.permute.xlu0 %381
  %383 = vset.pattern.permute.xlu0 1
  %384 = vperm.xlu0 %383, %v21
  %v385 = vpop.permute.xlu0 %384
  %386 = vset.pattern.permute.xlu0 1
  %387 = vperm.xlu0 %386, %v22
  %v388 = vpop.permute.xlu0 %387
  %389 = vset.pattern.permute.xlu0 1
  %390 = vperm.xlu0 %389, %v23
  %v391 = vpop.permute.xlu0 %390
  %392 = vset.pattern.permute.xlu0 1
  %393 = vperm.xlu0 %392, %v24
  %v394 = vpop.permute.xlu0 %393
  %395 = vset.pattern.permute.xlu0 1
  %396 = vperm.xlu0 %395, %v25
  %v397 = vpop.permute.xlu0 %396
  %398 = vset.pattern.permute.xlu0 1
  %399 = vperm.xlu0 %398, %v26
  %v400 = vpop.permute.xlu0 %399
  %401 = vset.pattern.permute.xlu0 1
  %402 = vperm.xlu0 %401, %v27
  %v403 = vpop.permute.xlu0 %402
  %404 = vset.pattern.permute.xlu0 1
  %405 = vperm.xlu0 %404, %v28
  %v406 = vpop.permute.xlu0 %405
  %407 = vset.pattern.permute.xlu0 1
  %408 = vperm.xlu0 %407, %v29
  %v409 = vpop.permute.xlu0 %408
  %410 = vset.pattern.permute.xlu0 1
  %411 = vperm.xlu0 %410, %v30
  %v412 = vpop.permute.xlu0 %411
  %413 = vset.pattern.permute.xlu0 1
  %414 = vperm.xlu0 %413, %v31
  %v415 = vpop.permute.xlu0 %414
  %416 = vset.pattern.permute.xlu0 1
  %417 = vperm.xlu0 %416, %v32
  %v418 = vpop.permute.xlu0 %417
  %419 = vset.pattern.permute.xlu0 1
  %420 = vperm.xlu0 %419, %v33
  %v421 = vpop.permute.xlu0 %420
  %422 = vset.pattern.permute.xlu0 1
  %423 = vperm.xlu0 %422, %v34
  %v424 = vpop.permute.xlu0 %423
  %425 = vset.pattern.permute.xlu0 1
  %426 = vperm.xlu0 %425, %v35
  %v427 = vpop.permute.xlu0 %426
  %428 = vset.pattern.permute.xlu0 1
  %429 = vperm.xlu0 %428, %v36
  %v430 = vpop.permute.xlu0 %429
  %431 = vset.pattern.permute.xlu0 1
  %432 = vperm.xlu0 %431, %v37
  %v433 = vpop.permute.xlu0 %432
  %434 = vset.pattern.permute.xlu0 1
  %435 = vperm.xlu0 %434, %v38
  %v436 = vpop.permute.xlu0 %435
  %437 = vset.pattern.permute.xlu0 1
  %438 = vperm.xlu0 %437, %v39
  %v439 = vpop.permute.xlu0 %438
  %440 = vset.pattern.permute.xlu0 1
  %441 = vperm.xlu0 %440, %v40
  %v442 = vpop.permute.xlu0 %441
  %443 = vset.pattern.permute.xlu0 1
  %444 = vperm.xlu0 %443, %v41
  %v445 = vpop.permute.xlu0 %444
  %446 = vset.pattern.permute.xlu0 1
  %447 = vperm.xlu0 %446, %v42
  %v448 = vpop.permute.xlu0 %447
  %449 = vset.pattern.permute.xlu0 1
  %450 = vperm.xlu0 %449, %v43
  %v451 = vpop.permute.xlu0 %450
  %452 = vset.pattern.permute.xlu0 1
  %453 = vperm.xlu0 %452, %v44
  %v454 = vpop.permute.xlu0 %453
  %455 = vset.pattern.permute.xlu0 1
  %456 = vperm.xlu0 %455, %v45
  %v457 = vpop.permute.xlu0 %456
  %458 = vset.pattern.permute.xlu0 1
  %459 = vperm.xlu0 %458, %v46
  %v460 = vpop.permute.xlu0 %459
  %461 = vset.pattern.permute.xlu0 1
  %462 = vperm.xlu0 %461, %v47
  %v463 = vpop.permute.xlu0 %462
  %464 = vset.pattern.permute.xlu0 1
  %465 = vperm.xlu0 %464, %v48
  %v466 = vpop.permute.xlu0 %465
  %vm467 = vcmp.eq.s32.totalorder %v50, %v373
  %vm468 = vcmp.eq.s32.totalorder %v50, %v376
  %vm469 = vcmp.eq.s32.totalorder %v50, %v379
  %vm470 = vcmp.eq.s32.totalorder %v50, %v382
  %vm471 = vcmp.eq.s32.totalorder %v50, %v385
  %vm472 = vcmp.eq.s32.totalorder %v50, %v388
  %vm473 = vcmp.eq.s32.totalorder %v50, %v391
  %vm474 = vcmp.eq.s32.totalorder %v50, %v394
  %vm475 = vcmp.eq.s32.totalorder %v50, %v397
  %vm476 = vcmp.eq.s32.totalorder %v50, %v400
  %vm477 = vcmp.eq.s32.totalorder %v50, %v403
  %vm478 = vcmp.eq.s32.totalorder %v50, %v406
  %vm479 = vcmp.eq.s32.totalorder %v50, %v409
  %vm480 = vcmp.eq.s32.totalorder %v50, %v412
  %vm481 = vcmp.eq.s32.totalorder %v50, %v415
  %vm482 = vcmp.eq.s32.totalorder %v50, %v418
  %vm483 = vcmp.eq.s32.totalorder %v50, %v421
  %vm484 = vcmp.eq.s32.totalorder %v50, %v424
  %vm485 = vcmp.eq.s32.totalorder %v50, %v427
  %vm486 = vcmp.eq.s32.totalorder %v50, %v430
  %vm487 = vcmp.eq.s32.totalorder %v50, %v433
  %vm488 = vcmp.eq.s32.totalorder %v50, %v436
  %vm489 = vcmp.eq.s32.totalorder %v50, %v439
  %vm490 = vcmp.eq.s32.totalorder %v50, %v442
  %vm491 = vcmp.eq.s32.totalorder %v50, %v445
  %vm492 = vcmp.eq.s32.totalorder %v50, %v448
  %vm493 = vcmp.eq.s32.totalorder %v50, %v451
  %vm494 = vcmp.eq.s32.totalorder %v50, %v454
  %vm495 = vcmp.eq.s32.totalorder %v50, %v457
  %vm496 = vcmp.eq.s32.totalorder %v50, %v460
  %vm497 = vcmp.eq.s32.totalorder %v50, %v463
  %vm498 = vcmp.eq.s32.totalorder %v50, %v466
  %v499 = vsel %vm467, 1, 0
  %v500 = vsel %vm468, 1, 0
  %v501 = vsel %vm469, 1, 0
  %v502 = vsel %vm470, 1, 0
  %v503 = vsel %vm471, 1, 0
  %v504 = vsel %vm472, 1, 0
  %v505 = vsel %vm473, 1, 0
  %v506 = vsel %vm474, 1, 0
  %v507 = vsel %vm475, 1, 0
  %v508 = vsel %vm476, 1, 0
  %v509 = vsel %vm477, 1, 0
  %v510 = vsel %vm478, 1, 0
  %v511 = vsel %vm479, 1, 0
  %v512 = vsel %vm480, 1, 0
  %v513 = vsel %vm481, 1, 0
  %v514 = vsel %vm482, 1, 0
  %v515 = vsel %vm483, 1, 0
  %v516 = vsel %vm484, 1, 0
  %v517 = vsel %vm485, 1, 0
  %v518 = vsel %vm486, 1, 0
  %v519 = vsel %vm487, 1, 0
  %v520 = vsel %vm488, 1, 0
  %v521 = vsel %vm489, 1, 0
  %v522 = vsel %vm490, 1, 0
  %v523 = vsel %vm491, 1, 0
  %v524 = vsel %vm492, 1, 0
  %v525 = vsel %vm493, 1, 0
  %v526 = vsel %vm494, 1, 0
  %v527 = vsel %vm495, 1, 0
  %v528 = vsel %vm496, 1, 0
  %v529 = vsel %vm497, 1, 0
  %v530 = vsel %vm498, 1, 0
  %v531 = vcvt.s32.f32 %v499
  %v532 = vcvt.s32.f32 %v500
  %v533 = vcvt.s32.f32 %v501
  %v534 = vcvt.s32.f32 %v502
  %v535 = vcvt.s32.f32 %v503
  %v536 = vcvt.s32.f32 %v504
  %v537 = vcvt.s32.f32 %v505
  %v538 = vcvt.s32.f32 %v506
  %v539 = vcvt.s32.f32 %v507
  %v540 = vcvt.s32.f32 %v508
  %v541 = vcvt.s32.f32 %v509
  %v542 = vcvt.s32.f32 %v510
  %v543 = vcvt.s32.f32 %v511
  %v544 = vcvt.s32.f32 %v512
  %v545 = vcvt.s32.f32 %v513
  %v546 = vcvt.s32.f32 %v514
  %v547 = vcvt.s32.f32 %v515
  %v548 = vcvt.s32.f32 %v516
  %v549 = vcvt.s32.f32 %v517
  %v550 = vcvt.s32.f32 %v518
  %v551 = vcvt.s32.f32 %v519
  %v552 = vcvt.s32.f32 %v520
  %v553 = vcvt.s32.f32 %v521
  %v554 = vcvt.s32.f32 %v522
  %v555 = vcvt.s32.f32 %v523
  %v556 = vcvt.s32.f32 %v524
  %v557 = vcvt.s32.f32 %v525
  %v558 = vcvt.s32.f32 %v526
  %v559 = vcvt.s32.f32 %v527
  %v560 = vcvt.s32.f32 %v528
  %v561 = vcvt.s32.f32 %v529
  %v562 = vcvt.s32.f32 %v530
  %v563 = vpack.c.bf16 %v531, %v531
  %v564 = vpack.c.bf16 %v532, %v532
  %v565 = vpack.c.bf16 %v533, %v533
  %v566 = vpack.c.bf16 %v534, %v534
  %v567 = vpack.c.bf16 %v535, %v535
  %v568 = vpack.c.bf16 %v536, %v536
  %v569 = vpack.c.bf16 %v537, %v537
  %v570 = vpack.c.bf16 %v538, %v538
  %v571 = vpack.c.bf16 %v539, %v539
  %v572 = vpack.c.bf16 %v540, %v540
  %v573 = vpack.c.bf16 %v541, %v541
  %v574 = vpack.c.bf16 %v542, %v542
  %v575 = vpack.c.bf16 %v543, %v543
  %v576 = vpack.c.bf16 %v544, %v544
  %v577 = vpack.c.bf16 %v545, %v545
  %v578 = vpack.c.bf16 %v546, %v546
  %v579 = vpack.c.bf16 %v547, %v547
  %v580 = vpack.c.bf16 %v548, %v548
  %v581 = vpack.c.bf16 %v549, %v549
  %v582 = vpack.c.bf16 %v550, %v550
  %v583 = vpack.c.bf16 %v551, %v551
  %v584 = vpack.c.bf16 %v552, %v552
  %v585 = vpack.c.bf16 %v553, %v553
  %v586 = vpack.c.bf16 %v554, %v554
  %v587 = vpack.c.bf16 %v555, %v555
  %v588 = vpack.c.bf16 %v556, %v556
  %v589 = vpack.c.bf16 %v557, %v557
  %v590 = vpack.c.bf16 %v558, %v558
  %v591 = vpack.c.bf16 %v559, %v559
  %v592 = vpack.c.bf16 %v560, %v560
  %v593 = vpack.c.bf16 %v561, %v561
  %v594 = vpack.c.bf16 %v562, %v562
  %v595 = vunpack.c.l.bf16 %v339
  %v596 = vunpack.c.l.bf16 %v340
  %v597 = vunpack.c.l.bf16 %v341
  %v598 = vunpack.c.l.bf16 %v342
  %v599 = vunpack.c.l.bf16 %v343
  %v600 = vunpack.c.l.bf16 %v344
  %v601 = vunpack.c.l.bf16 %v345
  %v602 = vunpack.c.l.bf16 %v346
  %v603 = vunpack.c.l.bf16 %v347
  %v604 = vunpack.c.l.bf16 %v348
  %v605 = vunpack.c.l.bf16 %v349
  %v606 = vunpack.c.l.bf16 %v350
  %v607 = vunpack.c.l.bf16 %v351
  %v608 = vunpack.c.l.bf16 %v352
  %v609 = vunpack.c.l.bf16 %v353
  %v610 = vunpack.c.l.bf16 %v354
  %v611 = vunpack.c.l.bf16 %v355
  %v612 = vunpack.c.l.bf16 %v356
  %v613 = vunpack.c.l.bf16 %v357
  %v614 = vunpack.c.l.bf16 %v358
  %v615 = vunpack.c.l.bf16 %v359
  %v616 = vunpack.c.l.bf16 %v360
  %v617 = vunpack.c.l.bf16 %v361
  %v618 = vunpack.c.l.bf16 %v362
  %v619 = vunpack.c.l.bf16 %v363
  %v620 = vunpack.c.l.bf16 %v364
  %v621 = vunpack.c.l.bf16 %v365
  %v622 = vunpack.c.l.bf16 %v366
  %v623 = vunpack.c.l.bf16 %v367
  %v624 = vunpack.c.l.bf16 %v368
  %v625 = vunpack.c.l.bf16 %v369
  %v626 = vunpack.c.l.bf16 %v370
  %v627 = vunpack.c.l.bf16 %v563
  %v628 = vunpack.c.l.bf16 %v564
  %v629 = vunpack.c.l.bf16 %v565
  %v630 = vunpack.c.l.bf16 %v566
  %v631 = vunpack.c.l.bf16 %v567
  %v632 = vunpack.c.l.bf16 %v568
  %v633 = vunpack.c.l.bf16 %v569
  %v634 = vunpack.c.l.bf16 %v570
  %v635 = vunpack.c.l.bf16 %v571
  %v636 = vunpack.c.l.bf16 %v572
  %v637 = vunpack.c.l.bf16 %v573
  %v638 = vunpack.c.l.bf16 %v574
  %v639 = vunpack.c.l.bf16 %v575
  %v640 = vunpack.c.l.bf16 %v576
  %v641 = vunpack.c.l.bf16 %v577
  %v642 = vunpack.c.l.bf16 %v578
  %v643 = vunpack.c.l.bf16 %v579
  %v644 = vunpack.c.l.bf16 %v580
  %v645 = vunpack.c.l.bf16 %v581
  %v646 = vunpack.c.l.bf16 %v582
  %v647 = vunpack.c.l.bf16 %v583
  %v648 = vunpack.c.l.bf16 %v584
  %v649 = vunpack.c.l.bf16 %v585
  %v650 = vunpack.c.l.bf16 %v586
  %v651 = vunpack.c.l.bf16 %v587
  %v652 = vunpack.c.l.bf16 %v588
  %v653 = vunpack.c.l.bf16 %v589
  %v654 = vunpack.c.l.bf16 %v590
  %v655 = vunpack.c.l.bf16 %v591
  %v656 = vunpack.c.l.bf16 %v592
  %v657 = vunpack.c.l.bf16 %v593
  %v658 = vunpack.c.l.bf16 %v594
  %v659 = vadd.f32 %v595, %v627
  %v660 = vadd.f32 %v596, %v628
  %v661 = vadd.f32 %v597, %v629
  %v662 = vadd.f32 %v598, %v630
  %v663 = vadd.f32 %v599, %v631
  %v664 = vadd.f32 %v600, %v632
  %v665 = vadd.f32 %v601, %v633
  %v666 = vadd.f32 %v602, %v634
  %v667 = vadd.f32 %v603, %v635
  %v668 = vadd.f32 %v604, %v636
  %v669 = vadd.f32 %v605, %v637
  %v670 = vadd.f32 %v606, %v638
  %v671 = vadd.f32 %v607, %v639
  %v672 = vadd.f32 %v608, %v640
  %v673 = vadd.f32 %v609, %v641
  %v674 = vadd.f32 %v610, %v642
  %v675 = vadd.f32 %v611, %v643
  %v676 = vadd.f32 %v612, %v644
  %v677 = vadd.f32 %v613, %v645
  %v678 = vadd.f32 %v614, %v646
  %v679 = vadd.f32 %v615, %v647
  %v680 = vadd.f32 %v616, %v648
  %v681 = vadd.f32 %v617, %v649
  %v682 = vadd.f32 %v618, %v650
  %v683 = vadd.f32 %v619, %v651
  %v684 = vadd.f32 %v620, %v652
  %v685 = vadd.f32 %v621, %v653
  %v686 = vadd.f32 %v622, %v654
  %v687 = vadd.f32 %v623, %v655
  %v688 = vadd.f32 %v624, %v656
  %v689 = vadd.f32 %v625, %v657
  %v690 = vadd.f32 %v626, %v658
  %v691 = vpack.c.bf16 %v659, %v659
  %v692 = vpack.c.bf16 %v660, %v660
  %v693 = vpack.c.bf16 %v661, %v661
  %v694 = vpack.c.bf16 %v662, %v662
  %v695 = vpack.c.bf16 %v663, %v663
  %v696 = vpack.c.bf16 %v664, %v664
  %v697 = vpack.c.bf16 %v665, %v665
  %v698 = vpack.c.bf16 %v666, %v666
  %v699 = vpack.c.bf16 %v667, %v667
  %v700 = vpack.c.bf16 %v668, %v668
  %v701 = vpack.c.bf16 %v669, %v669
  %v702 = vpack.c.bf16 %v670, %v670
  %v703 = vpack.c.bf16 %v671, %v671
  %v704 = vpack.c.bf16 %v672, %v672
  %v705 = vpack.c.bf16 %v673, %v673
  %v706 = vpack.c.bf16 %v674, %v674
  %v707 = vpack.c.bf16 %v675, %v675
  %v708 = vpack.c.bf16 %v676, %v676
  %v709 = vpack.c.bf16 %v677, %v677
  %v710 = vpack.c.bf16 %v678, %v678
  %v711 = vpack.c.bf16 %v679, %v679
  %v712 = vpack.c.bf16 %v680, %v680
  %v713 = vpack.c.bf16 %v681, %v681
  %v714 = vpack.c.bf16 %v682, %v682
  %v715 = vpack.c.bf16 %v683, %v683
  %v716 = vpack.c.bf16 %v684, %v684
  %v717 = vpack.c.bf16 %v685, %v685
  %v718 = vpack.c.bf16 %v686, %v686
  %v719 = vpack.c.bf16 %v687, %v687
  %v720 = vpack.c.bf16 %v688, %v688
  %v721 = vpack.c.bf16 %v689, %v689
  %v722 = vpack.c.bf16 %v690, %v690
  %723 = vset.pattern.permute.xlu0 2
  %724 = vperm.xlu0 %723, %v17
  %v725 = vpop.permute.xlu0 %724
  %726 = vset.pattern.permute.xlu0 2
  %727 = vperm.xlu0 %726, %v18
  %v728 = vpop.permute.xlu0 %727
  %729 = vset.pattern.permute.xlu0 2
  %730 = vperm.xlu0 %729, %v19
  %v731 = vpop.permute.xlu0 %730
  %732 = vset.pattern.permute.xlu0 2
  %733 = vperm.xlu0 %732, %v20
  %v734 = vpop.permute.xlu0 %733
  %735 = vset.pattern.permute.xlu0 2
  %736 = vperm.xlu0 %735, %v21
  %v737 = vpop.permute.xlu0 %736
  %738 = vset.pattern.permute.xlu0 2
  %739 = vperm.xlu0 %738, %v22
  %v740 = vpop.permute.xlu0 %739
  %741 = vset.pattern.permute.xlu0 2
  %742 = vperm.xlu0 %741, %v23
  %v743 = vpop.permute.xlu0 %742
  %744 = vset.pattern.permute.xlu0 2
  %745 = vperm.xlu0 %744, %v24
  %v746 = vpop.permute.xlu0 %745
  %747 = vset.pattern.permute.xlu0 2
  %748 = vperm.xlu0 %747, %v25
  %v749 = vpop.permute.xlu0 %748
  %750 = vset.pattern.permute.xlu0 2
  %751 = vperm.xlu0 %750, %v26
  %v752 = vpop.permute.xlu0 %751
  %753 = vset.pattern.permute.xlu0 2
  %754 = vperm.xlu0 %753, %v27
  %v755 = vpop.permute.xlu0 %754
  %756 = vset.pattern.permute.xlu0 2
  %757 = vperm.xlu0 %756, %v28
  %v758 = vpop.permute.xlu0 %757
  %759 = vset.pattern.permute.xlu0 2
  %760 = vperm.xlu0 %759, %v29
  %v761 = vpop.permute.xlu0 %760
  %762 = vset.pattern.permute.xlu0 2
  %763 = vperm.xlu0 %762, %v30
  %v764 = vpop.permute.xlu0 %763
  %765 = vset.pattern.permute.xlu0 2
  %766 = vperm.xlu0 %765, %v31
  %v767 = vpop.permute.xlu0 %766
  %768 = vset.pattern.permute.xlu0 2
  %769 = vperm.xlu0 %768, %v32
  %v770 = vpop.permute.xlu0 %769
  %771 = vset.pattern.permute.xlu0 2
  %772 = vperm.xlu0 %771, %v33
  %v773 = vpop.permute.xlu0 %772
  %774 = vset.pattern.permute.xlu0 2
  %775 = vperm.xlu0 %774, %v34
  %v776 = vpop.permute.xlu0 %775
  %777 = vset.pattern.permute.xlu0 2
  %778 = vperm.xlu0 %777, %v35
  %v779 = vpop.permute.xlu0 %778
  %780 = vset.pattern.permute.xlu0 2
  %781 = vperm.xlu0 %780, %v36
  %v782 = vpop.permute.xlu0 %781
  %783 = vset.pattern.permute.xlu0 2
  %784 = vperm.xlu0 %783, %v37
  %v785 = vpop.permute.xlu0 %784
  %786 = vset.pattern.permute.xlu0 2
  %787 = vperm.xlu0 %786, %v38
  %v788 = vpop.permute.xlu0 %787
  %789 = vset.pattern.permute.xlu0 2
  %790 = vperm.xlu0 %789, %v39
  %v791 = vpop.permute.xlu0 %790
  %792 = vset.pattern.permute.xlu0 2
  %793 = vperm.xlu0 %792, %v40
  %v794 = vpop.permute.xlu0 %793
  %795 = vset.pattern.permute.xlu0 2
  %796 = vperm.xlu0 %795, %v41
  %v797 = vpop.permute.xlu0 %796
  %798 = vset.pattern.permute.xlu0 2
  %799 = vperm.xlu0 %798, %v42
  %v800 = vpop.permute.xlu0 %799
  %801 = vset.pattern.permute.xlu0 2
  %802 = vperm.xlu0 %801, %v43
  %v803 = vpop.permute.xlu0 %802
  %804 = vset.pattern.permute.xlu0 2
  %805 = vperm.xlu0 %804, %v44
  %v806 = vpop.permute.xlu0 %805
  %807 = vset.pattern.permute.xlu0 2
  %808 = vperm.xlu0 %807, %v45
  %v809 = vpop.permute.xlu0 %808
  %810 = vset.pattern.permute.xlu0 2
  %811 = vperm.xlu0 %810, %v46
  %v812 = vpop.permute.xlu0 %811
  %813 = vset.pattern.permute.xlu0 2
  %814 = vperm.xlu0 %813, %v47
  %v815 = vpop.permute.xlu0 %814
  %816 = vset.pattern.permute.xlu0 2
  %817 = vperm.xlu0 %816, %v48
  %v818 = vpop.permute.xlu0 %817
  %vm819 = vcmp.eq.s32.totalorder %v50, %v725
  %vm820 = vcmp.eq.s32.totalorder %v50, %v728
  %vm821 = vcmp.eq.s32.totalorder %v50, %v731
  %vm822 = vcmp.eq.s32.totalorder %v50, %v734
  %vm823 = vcmp.eq.s32.totalorder %v50, %v737
  %vm824 = vcmp.eq.s32.totalorder %v50, %v740
  %vm825 = vcmp.eq.s32.totalorder %v50, %v743
  %vm826 = vcmp.eq.s32.totalorder %v50, %v746
  %vm827 = vcmp.eq.s32.totalorder %v50, %v749
  %vm828 = vcmp.eq.s32.totalorder %v50, %v752
  %vm829 = vcmp.eq.s32.totalorder %v50, %v755
  %vm830 = vcmp.eq.s32.totalorder %v50, %v758
  %vm831 = vcmp.eq.s32.totalorder %v50, %v761
  %vm832 = vcmp.eq.s32.totalorder %v50, %v764
  %vm833 = vcmp.eq.s32.totalorder %v50, %v767
  %vm834 = vcmp.eq.s32.totalorder %v50, %v770
  %vm835 = vcmp.eq.s32.totalorder %v50, %v773
  %vm836 = vcmp.eq.s32.totalorder %v50, %v776
  %vm837 = vcmp.eq.s32.totalorder %v50, %v779
  %vm838 = vcmp.eq.s32.totalorder %v50, %v782
  %vm839 = vcmp.eq.s32.totalorder %v50, %v785
  %vm840 = vcmp.eq.s32.totalorder %v50, %v788
  %vm841 = vcmp.eq.s32.totalorder %v50, %v791
  %vm842 = vcmp.eq.s32.totalorder %v50, %v794
  %vm843 = vcmp.eq.s32.totalorder %v50, %v797
  %vm844 = vcmp.eq.s32.totalorder %v50, %v800
  %vm845 = vcmp.eq.s32.totalorder %v50, %v803
  %vm846 = vcmp.eq.s32.totalorder %v50, %v806
  %vm847 = vcmp.eq.s32.totalorder %v50, %v809
  %vm848 = vcmp.eq.s32.totalorder %v50, %v812
  %vm849 = vcmp.eq.s32.totalorder %v50, %v815
  %vm850 = vcmp.eq.s32.totalorder %v50, %v818
  %v851 = vsel %vm819, 1, 0
  %v852 = vsel %vm820, 1, 0
  %v853 = vsel %vm821, 1, 0
  %v854 = vsel %vm822, 1, 0
  %v855 = vsel %vm823, 1, 0
  %v856 = vsel %vm824, 1, 0
  %v857 = vsel %vm825, 1, 0
  %v858 = vsel %vm826, 1, 0
  %v859 = vsel %vm827, 1, 0
  %v860 = vsel %vm828, 1, 0
  %v861 = vsel %vm829, 1, 0
  %v862 = vsel %vm830, 1, 0
  %v863 = vsel %vm831, 1, 0
  %v864 = vsel %vm832, 1, 0
  %v865 = vsel %vm833, 1, 0
  %v866 = vsel %vm834, 1, 0
  %v867 = vsel %vm835, 1, 0
  %v868 = vsel %vm836, 1, 0
  %v869 = vsel %vm837, 1, 0
  %v870 = vsel %vm838, 1, 0
  %v871 = vsel %vm839, 1, 0
  %v872 = vsel %vm840, 1, 0
  %v873 = vsel %vm841, 1, 0
  %v874 = vsel %vm842, 1, 0
  %v875 = vsel %vm843, 1, 0
  %v876 = vsel %vm844, 1, 0
  %v877 = vsel %vm845, 1, 0
  %v878 = vsel %vm846, 1, 0
  %v879 = vsel %vm847, 1, 0
  %v880 = vsel %vm848, 1, 0
  %v881 = vsel %vm849, 1, 0
  %v882 = vsel %vm850, 1, 0
  %v883 = vcvt.s32.f32 %v851
  %v884 = vcvt.s32.f32 %v852
  %v885 = vcvt.s32.f32 %v853
  %v886 = vcvt.s32.f32 %v854
  %v887 = vcvt.s32.f32 %v855
  %v888 = vcvt.s32.f32 %v856
  %v889 = vcvt.s32.f32 %v857
  %v890 = vcvt.s32.f32 %v858
  %v891 = vcvt.s32.f32 %v859
  %v892 = vcvt.s32.f32 %v860
  %v893 = vcvt.s32.f32 %v861
  %v894 = vcvt.s32.f32 %v862
  %v895 = vcvt.s32.f32 %v863
  %v896 = vcvt.s32.f32 %v864
  %v897 = vcvt.s32.f32 %v865
  %v898 = vcvt.s32.f32 %v866
  %v899 = vcvt.s32.f32 %v867
  %v900 = vcvt.s32.f32 %v868
  %v901 = vcvt.s32.f32 %v869
  %v902 = vcvt.s32.f32 %v870
  %v903 = vcvt.s32.f32 %v871
  %v904 = vcvt.s32.f32 %v872
  %v905 = vcvt.s32.f32 %v873
  %v906 = vcvt.s32.f32 %v874
  %v907 = vcvt.s32.f32 %v875
  %v908 = vcvt.s32.f32 %v876
  %v909 = vcvt.s32.f32 %v877
  %v910 = vcvt.s32.f32 %v878
  %v911 = vcvt.s32.f32 %v879
  %v912 = vcvt.s32.f32 %v880
  %v913 = vcvt.s32.f32 %v881
  %v914 = vcvt.s32.f32 %v882
  %v915 = vpack.c.bf16 %v883, %v883
  %v916 = vpack.c.bf16 %v884, %v884
  %v917 = vpack.c.bf16 %v885, %v885
  %v918 = vpack.c.bf16 %v886, %v886
  %v919 = vpack.c.bf16 %v887, %v887
  %v920 = vpack.c.bf16 %v888, %v888
  %v921 = vpack.c.bf16 %v889, %v889
  %v922 = vpack.c.bf16 %v890, %v890
  %v923 = vpack.c.bf16 %v891, %v891
  %v924 = vpack.c.bf16 %v892, %v892
  %v925 = vpack.c.bf16 %v893, %v893
  %v926 = vpack.c.bf16 %v894, %v894
  %v927 = vpack.c.bf16 %v895, %v895
  %v928 = vpack.c.bf16 %v896, %v896
  %v929 = vpack.c.bf16 %v897, %v897
  %v930 = vpack.c.bf16 %v898, %v898
  %v931 = vpack.c.bf16 %v899, %v899
  %v932 = vpack.c.bf16 %v900, %v900
  %v933 = vpack.c.bf16 %v901, %v901
  %v934 = vpack.c.bf16 %v902, %v902
  %v935 = vpack.c.bf16 %v903, %v903
  %v936 = vpack.c.bf16 %v904, %v904
  %v937 = vpack.c.bf16 %v905, %v905
  %v938 = vpack.c.bf16 %v906, %v906
  %v939 = vpack.c.bf16 %v907, %v907
  %v940 = vpack.c.bf16 %v908, %v908
  %v941 = vpack.c.bf16 %v909, %v909
  %v942 = vpack.c.bf16 %v910, %v910
  %v943 = vpack.c.bf16 %v911, %v911
  %v944 = vpack.c.bf16 %v912, %v912
  %v945 = vpack.c.bf16 %v913, %v913
  %v946 = vpack.c.bf16 %v914, %v914
  %v947 = vunpack.c.l.bf16 %v691
  %v948 = vunpack.c.l.bf16 %v692
  %v949 = vunpack.c.l.bf16 %v693
  %v950 = vunpack.c.l.bf16 %v694
  %v951 = vunpack.c.l.bf16 %v695
  %v952 = vunpack.c.l.bf16 %v696
  %v953 = vunpack.c.l.bf16 %v697
  %v954 = vunpack.c.l.bf16 %v698
  %v955 = vunpack.c.l.bf16 %v699
  %v956 = vunpack.c.l.bf16 %v700
  %v957 = vunpack.c.l.bf16 %v701
  %v958 = vunpack.c.l.bf16 %v702
  %v959 = vunpack.c.l.bf16 %v703
  %v960 = vunpack.c.l.bf16 %v704
  %v961 = vunpack.c.l.bf16 %v705
  %v962 = vunpack.c.l.bf16 %v706
  %v963 = vunpack.c.l.bf16 %v707
  %v964 = vunpack.c.l.bf16 %v708
  %v965 = vunpack.c.l.bf16 %v709
  %v966 = vunpack.c.l.bf16 %v710
  %v967 = vunpack.c.l.bf16 %v711
  %v968 = vunpack.c.l.bf16 %v712
  %v969 = vunpack.c.l.bf16 %v713
  %v970 = vunpack.c.l.bf16 %v714
  %v971 = vunpack.c.l.bf16 %v715
  %v972 = vunpack.c.l.bf16 %v716
  %v973 = vunpack.c.l.bf16 %v717
  %v974 = vunpack.c.l.bf16 %v718
  %v975 = vunpack.c.l.bf16 %v719
  %v976 = vunpack.c.l.bf16 %v720
  %v977 = vunpack.c.l.bf16 %v721
  %v978 = vunpack.c.l.bf16 %v722
  %v979 = vunpack.c.l.bf16 %v915
  %v980 = vunpack.c.l.bf16 %v916
  %v981 = vunpack.c.l.bf16 %v917
  %v982 = vunpack.c.l.bf16 %v918
  %v983 = vunpack.c.l.bf16 %v919
  %v984 = vunpack.c.l.bf16 %v920
  %v985 = vunpack.c.l.bf16 %v921
  %v986 = vunpack.c.l.bf16 %v922
  %v987 = vunpack.c.l.bf16 %v923
  %v988 = vunpack.c.l.bf16 %v924
  %v989 = vunpack.c.l.bf16 %v925
  %v990 = vunpack.c.l.bf16 %v926
  %v991 = vunpack.c.l.bf16 %v927
  %v992 = vunpack.c.l.bf16 %v928
  %v993 = vunpack.c.l.bf16 %v929
  %v994 = vunpack.c.l.bf16 %v930
  %v995 = vunpack.c.l.bf16 %v931
  %v996 = vunpack.c.l.bf16 %v932
  %v997 = vunpack.c.l.bf16 %v933
  %v998 = vunpack.c.l.bf16 %v934
  %v999 = vunpack.c.l.bf16 %v935
  %v1000 = vunpack.c.l.bf16 %v936
  %v1001 = vunpack.c.l.bf16 %v937
  %v1002 = vunpack.c.l.bf16 %v938
  %v1003 = vunpack.c.l.bf16 %v939
  %v1004 = vunpack.c.l.bf16 %v940
  %v1005 = vunpack.c.l.bf16 %v941
  %v1006 = vunpack.c.l.bf16 %v942
  %v1007 = vunpack.c.l.bf16 %v943
  %v1008 = vunpack.c.l.bf16 %v944
  %v1009 = vunpack.c.l.bf16 %v945
  %v1010 = vunpack.c.l.bf16 %v946
  %v1011 = vadd.f32 %v947, %v979
  %v1012 = vadd.f32 %v948, %v980
  %v1013 = vadd.f32 %v949, %v981
  %v1014 = vadd.f32 %v950, %v982
  %v1015 = vadd.f32 %v951, %v983
  %v1016 = vadd.f32 %v952, %v984
  %v1017 = vadd.f32 %v953, %v985
  %v1018 = vadd.f32 %v954, %v986
  %v1019 = vadd.f32 %v955, %v987
  %v1020 = vadd.f32 %v956, %v988
  %v1021 = vadd.f32 %v957, %v989
  %v1022 = vadd.f32 %v958, %v990
  %v1023 = vadd.f32 %v959, %v991
  %v1024 = vadd.f32 %v960, %v992
  %v1025 = vadd.f32 %v961, %v993
  %v1026 = vadd.f32 %v962, %v994
  %v1027 = vadd.f32 %v963, %v995
  %v1028 = vadd.f32 %v964, %v996
  %v1029 = vadd.f32 %v965, %v997
  %v1030 = vadd.f32 %v966, %v998
  %v1031 = vadd.f32 %v967, %v999
  %v1032 = vadd.f32 %v968, %v1000
  %v1033 = vadd.f32 %v969, %v1001
  %v1034 = vadd.f32 %v970, %v1002
  %v1035 = vadd.f32 %v971, %v1003
  %v1036 = vadd.f32 %v972, %v1004
  %v1037 = vadd.f32 %v973, %v1005
  %v1038 = vadd.f32 %v974, %v1006
  %v1039 = vadd.f32 %v975, %v1007
  %v1040 = vadd.f32 %v976, %v1008
  %v1041 = vadd.f32 %v977, %v1009
  %v1042 = vadd.f32 %v978, %v1010
  %v1043 = vpack.c.bf16 %v1011, %v1011
  %v1044 = vpack.c.bf16 %v1012, %v1012
  %v1045 = vpack.c.bf16 %v1013, %v1013
  %v1046 = vpack.c.bf16 %v1014, %v1014
  %v1047 = vpack.c.bf16 %v1015, %v1015
  %v1048 = vpack.c.bf16 %v1016, %v1016
  %v1049 = vpack.c.bf16 %v1017, %v1017
  %v1050 = vpack.c.bf16 %v1018, %v1018
  %v1051 = vpack.c.bf16 %v1019, %v1019
  %v1052 = vpack.c.bf16 %v1020, %v1020
  %v1053 = vpack.c.bf16 %v1021, %v1021
  %v1054 = vpack.c.bf16 %v1022, %v1022
  %v1055 = vpack.c.bf16 %v1023, %v1023
  %v1056 = vpack.c.bf16 %v1024, %v1024
  %v1057 = vpack.c.bf16 %v1025, %v1025
  %v1058 = vpack.c.bf16 %v1026, %v1026
  %v1059 = vpack.c.bf16 %v1027, %v1027
  %v1060 = vpack.c.bf16 %v1028, %v1028
  %v1061 = vpack.c.bf16 %v1029, %v1029
  %v1062 = vpack.c.bf16 %v1030, %v1030
  %v1063 = vpack.c.bf16 %v1031, %v1031
  %v1064 = vpack.c.bf16 %v1032, %v1032
  %v1065 = vpack.c.bf16 %v1033, %v1033
  %v1066 = vpack.c.bf16 %v1034, %v1034
  %v1067 = vpack.c.bf16 %v1035, %v1035
  %v1068 = vpack.c.bf16 %v1036, %v1036
  %v1069 = vpack.c.bf16 %v1037, %v1037
  %v1070 = vpack.c.bf16 %v1038, %v1038
  %v1071 = vpack.c.bf16 %v1039, %v1039
  %v1072 = vpack.c.bf16 %v1040, %v1040
  %v1073 = vpack.c.bf16 %v1041, %v1041
  %v1074 = vpack.c.bf16 %v1042, %v1042
  %1075 = vset.pattern.permute.xlu0 3
  %1076 = vperm.xlu0 %1075, %v17
  %v1077 = vpop.permute.xlu0 %1076
  %1078 = vset.pattern.permute.xlu0 3
  %1079 = vperm.xlu0 %1078, %v18
  %v1080 = vpop.permute.xlu0 %1079
  %1081 = vset.pattern.permute.xlu0 3
  %1082 = vperm.xlu0 %1081, %v19
  %v1083 = vpop.permute.xlu0 %1082
  %1084 = vset.pattern.permute.xlu0 3
  %1085 = vperm.xlu0 %1084, %v20
  %v1086 = vpop.permute.xlu0 %1085
  %1087 = vset.pattern.permute.xlu0 3
  %1088 = vperm.xlu0 %1087, %v21
  %v1089 = vpop.permute.xlu0 %1088
  %1090 = vset.pattern.permute.xlu0 3
  %1091 = vperm.xlu0 %1090, %v22
  %v1092 = vpop.permute.xlu0 %1091
  %1093 = vset.pattern.permute.xlu0 3
  %1094 = vperm.xlu0 %1093, %v23
  %v1095 = vpop.permute.xlu0 %1094
  %1096 = vset.pattern.permute.xlu0 3
  %1097 = vperm.xlu0 %1096, %v24
  %v1098 = vpop.permute.xlu0 %1097
  %1099 = vset.pattern.permute.xlu0 3
  %1100 = vperm.xlu0 %1099, %v25
  %v1101 = vpop.permute.xlu0 %1100
  %1102 = vset.pattern.permute.xlu0 3
  %1103 = vperm.xlu0 %1102, %v26
  %v1104 = vpop.permute.xlu0 %1103
  %1105 = vset.pattern.permute.xlu0 3
  %1106 = vperm.xlu0 %1105, %v27
  %v1107 = vpop.permute.xlu0 %1106
  %1108 = vset.pattern.permute.xlu0 3
  %1109 = vperm.xlu0 %1108, %v28
  %v1110 = vpop.permute.xlu0 %1109
  %1111 = vset.pattern.permute.xlu0 3
  %1112 = vperm.xlu0 %1111, %v29
  %v1113 = vpop.permute.xlu0 %1112
  %1114 = vset.pattern.permute.xlu0 3
  %1115 = vperm.xlu0 %1114, %v30
  %v1116 = vpop.permute.xlu0 %1115
  %1117 = vset.pattern.permute.xlu0 3
  %1118 = vperm.xlu0 %1117, %v31
  %v1119 = vpop.permute.xlu0 %1118
  %1120 = vset.pattern.permute.xlu0 3
  %1121 = vperm.xlu0 %1120, %v32
  %v1122 = vpop.permute.xlu0 %1121
  %1123 = vset.pattern.permute.xlu0 3
  %1124 = vperm.xlu0 %1123, %v33
  %v1125 = vpop.permute.xlu0 %1124
  %1126 = vset.pattern.permute.xlu0 3
  %1127 = vperm.xlu0 %1126, %v34
  %v1128 = vpop.permute.xlu0 %1127
  %1129 = vset.pattern.permute.xlu0 3
  %1130 = vperm.xlu0 %1129, %v35
  %v1131 = vpop.permute.xlu0 %1130
  %1132 = vset.pattern.permute.xlu0 3
  %1133 = vperm.xlu0 %1132, %v36
  %v1134 = vpop.permute.xlu0 %1133
  %1135 = vset.pattern.permute.xlu0 3
  %1136 = vperm.xlu0 %1135, %v37
  %v1137 = vpop.permute.xlu0 %1136
  %1138 = vset.pattern.permute.xlu0 3
  %1139 = vperm.xlu0 %1138, %v38
  %v1140 = vpop.permute.xlu0 %1139
  %1141 = vset.pattern.permute.xlu0 3
  %1142 = vperm.xlu0 %1141, %v39
  %v1143 = vpop.permute.xlu0 %1142
  %1144 = vset.pattern.permute.xlu0 3
  %1145 = vperm.xlu0 %1144, %v40
  %v1146 = vpop.permute.xlu0 %1145
  %1147 = vset.pattern.permute.xlu0 3
  %1148 = vperm.xlu0 %1147, %v41
  %v1149 = vpop.permute.xlu0 %1148
  %1150 = vset.pattern.permute.xlu0 3
  %1151 = vperm.xlu0 %1150, %v42
  %v1152 = vpop.permute.xlu0 %1151
  %1153 = vset.pattern.permute.xlu0 3
  %1154 = vperm.xlu0 %1153, %v43
  %v1155 = vpop.permute.xlu0 %1154
  %1156 = vset.pattern.permute.xlu0 3
  %1157 = vperm.xlu0 %1156, %v44
  %v1158 = vpop.permute.xlu0 %1157
  %1159 = vset.pattern.permute.xlu0 3
  %1160 = vperm.xlu0 %1159, %v45
  %v1161 = vpop.permute.xlu0 %1160
  %1162 = vset.pattern.permute.xlu0 3
  %1163 = vperm.xlu0 %1162, %v46
  %v1164 = vpop.permute.xlu0 %1163
  %1165 = vset.pattern.permute.xlu0 3
  %1166 = vperm.xlu0 %1165, %v47
  %v1167 = vpop.permute.xlu0 %1166
  %1168 = vset.pattern.permute.xlu0 3
  %1169 = vperm.xlu0 %1168, %v48
  %v1170 = vpop.permute.xlu0 %1169
  %vm1171 = vcmp.eq.s32.totalorder %v50, %v1077
  %vm1172 = vcmp.eq.s32.totalorder %v50, %v1080
  %vm1173 = vcmp.eq.s32.totalorder %v50, %v1083
  %vm1174 = vcmp.eq.s32.totalorder %v50, %v1086
  %vm1175 = vcmp.eq.s32.totalorder %v50, %v1089
  %vm1176 = vcmp.eq.s32.totalorder %v50, %v1092
  %vm1177 = vcmp.eq.s32.totalorder %v50, %v1095
  %vm1178 = vcmp.eq.s32.totalorder %v50, %v1098
  %vm1179 = vcmp.eq.s32.totalorder %v50, %v1101
  %vm1180 = vcmp.eq.s32.totalorder %v50, %v1104
  %vm1181 = vcmp.eq.s32.totalorder %v50, %v1107
  %vm1182 = vcmp.eq.s32.totalorder %v50, %v1110
  %vm1183 = vcmp.eq.s32.totalorder %v50, %v1113
  %vm1184 = vcmp.eq.s32.totalorder %v50, %v1116
  %vm1185 = vcmp.eq.s32.totalorder %v50, %v1119
  %vm1186 = vcmp.eq.s32.totalorder %v50, %v1122
  %vm1187 = vcmp.eq.s32.totalorder %v50, %v1125
  %vm1188 = vcmp.eq.s32.totalorder %v50, %v1128
  %vm1189 = vcmp.eq.s32.totalorder %v50, %v1131
  %vm1190 = vcmp.eq.s32.totalorder %v50, %v1134
  %vm1191 = vcmp.eq.s32.totalorder %v50, %v1137
  %vm1192 = vcmp.eq.s32.totalorder %v50, %v1140
  %vm1193 = vcmp.eq.s32.totalorder %v50, %v1143
  %vm1194 = vcmp.eq.s32.totalorder %v50, %v1146
  %vm1195 = vcmp.eq.s32.totalorder %v50, %v1149
  %vm1196 = vcmp.eq.s32.totalorder %v50, %v1152
  %vm1197 = vcmp.eq.s32.totalorder %v50, %v1155
  %vm1198 = vcmp.eq.s32.totalorder %v50, %v1158
  %vm1199 = vcmp.eq.s32.totalorder %v50, %v1161
  %vm1200 = vcmp.eq.s32.totalorder %v50, %v1164
  %vm1201 = vcmp.eq.s32.totalorder %v50, %v1167
  %vm1202 = vcmp.eq.s32.totalorder %v50, %v1170
  %v1203 = vsel %vm1171, 1, 0
  %v1204 = vsel %vm1172, 1, 0
  %v1205 = vsel %vm1173, 1, 0
  %v1206 = vsel %vm1174, 1, 0
  %v1207 = vsel %vm1175, 1, 0
  %v1208 = vsel %vm1176, 1, 0
  %v1209 = vsel %vm1177, 1, 0
  %v1210 = vsel %vm1178, 1, 0
  %v1211 = vsel %vm1179, 1, 0
  %v1212 = vsel %vm1180, 1, 0
  %v1213 = vsel %vm1181, 1, 0
  %v1214 = vsel %vm1182, 1, 0
  %v1215 = vsel %vm1183, 1, 0
  %v1216 = vsel %vm1184, 1, 0
  %v1217 = vsel %vm1185, 1, 0
  %v1218 = vsel %vm1186, 1, 0
  %v1219 = vsel %vm1187, 1, 0
  %v1220 = vsel %vm1188, 1, 0
  %v1221 = vsel %vm1189, 1, 0
  %v1222 = vsel %vm1190, 1, 0
  %v1223 = vsel %vm1191, 1, 0
  %v1224 = vsel %vm1192, 1, 0
  %v1225 = vsel %vm1193, 1, 0
  %v1226 = vsel %vm1194, 1, 0
  %v1227 = vsel %vm1195, 1, 0
  %v1228 = vsel %vm1196, 1, 0
  %v1229 = vsel %vm1197, 1, 0
  %v1230 = vsel %vm1198, 1, 0
  %v1231 = vsel %vm1199, 1, 0
  %v1232 = vsel %vm1200, 1, 0
  %v1233 = vsel %vm1201, 1, 0
  %v1234 = vsel %vm1202, 1, 0
  %v1235 = vcvt.s32.f32 %v1203
  %v1236 = vcvt.s32.f32 %v1204
  %v1237 = vcvt.s32.f32 %v1205
  %v1238 = vcvt.s32.f32 %v1206
  %v1239 = vcvt.s32.f32 %v1207
  %v1240 = vcvt.s32.f32 %v1208
  %v1241 = vcvt.s32.f32 %v1209
  %v1242 = vcvt.s32.f32 %v1210
  %v1243 = vcvt.s32.f32 %v1211
  %v1244 = vcvt.s32.f32 %v1212
  %v1245 = vcvt.s32.f32 %v1213
  %v1246 = vcvt.s32.f32 %v1214
  %v1247 = vcvt.s32.f32 %v1215
  %v1248 = vcvt.s32.f32 %v1216
  %v1249 = vcvt.s32.f32 %v1217
  %v1250 = vcvt.s32.f32 %v1218
  %v1251 = vcvt.s32.f32 %v1219
  %v1252 = vcvt.s32.f32 %v1220
  %v1253 = vcvt.s32.f32 %v1221
  %v1254 = vcvt.s32.f32 %v1222
  %v1255 = vcvt.s32.f32 %v1223
  %v1256 = vcvt.s32.f32 %v1224
  %v1257 = vcvt.s32.f32 %v1225
  %v1258 = vcvt.s32.f32 %v1226
  %v1259 = vcvt.s32.f32 %v1227
  %v1260 = vcvt.s32.f32 %v1228
  %v1261 = vcvt.s32.f32 %v1229
  %v1262 = vcvt.s32.f32 %v1230
  %v1263 = vcvt.s32.f32 %v1231
  %v1264 = vcvt.s32.f32 %v1232
  %v1265 = vcvt.s32.f32 %v1233
  %v1266 = vcvt.s32.f32 %v1234
  %v1267 = vpack.c.bf16 %v1235, %v1235
  %v1268 = vpack.c.bf16 %v1236, %v1236
  %v1269 = vpack.c.bf16 %v1237, %v1237
  %v1270 = vpack.c.bf16 %v1238, %v1238
  %v1271 = vpack.c.bf16 %v1239, %v1239
  %v1272 = vpack.c.bf16 %v1240, %v1240
  %v1273 = vpack.c.bf16 %v1241, %v1241
  %v1274 = vpack.c.bf16 %v1242, %v1242
  %v1275 = vpack.c.bf16 %v1243, %v1243
  %v1276 = vpack.c.bf16 %v1244, %v1244
  %v1277 = vpack.c.bf16 %v1245, %v1245
  %v1278 = vpack.c.bf16 %v1246, %v1246
  %v1279 = vpack.c.bf16 %v1247, %v1247
  %v1280 = vpack.c.bf16 %v1248, %v1248
  %v1281 = vpack.c.bf16 %v1249, %v1249
  %v1282 = vpack.c.bf16 %v1250, %v1250
  %v1283 = vpack.c.bf16 %v1251, %v1251
  %v1284 = vpack.c.bf16 %v1252, %v1252
  %v1285 = vpack.c.bf16 %v1253, %v1253
  %v1286 = vpack.c.bf16 %v1254, %v1254
  %v1287 = vpack.c.bf16 %v1255, %v1255
  %v1288 = vpack.c.bf16 %v1256, %v1256
  %v1289 = vpack.c.bf16 %v1257, %v1257
  %v1290 = vpack.c.bf16 %v1258, %v1258
  %v1291 = vpack.c.bf16 %v1259, %v1259
  %v1292 = vpack.c.bf16 %v1260, %v1260
  %v1293 = vpack.c.bf16 %v1261, %v1261
  %v1294 = vpack.c.bf16 %v1262, %v1262
  %v1295 = vpack.c.bf16 %v1263, %v1263
  %v1296 = vpack.c.bf16 %v1264, %v1264
  %v1297 = vpack.c.bf16 %v1265, %v1265
  %v1298 = vpack.c.bf16 %v1266, %v1266
  %v1299 = vunpack.c.l.bf16 %v1043
  %v1300 = vunpack.c.l.bf16 %v1044
  %v1301 = vunpack.c.l.bf16 %v1045
  %v1302 = vunpack.c.l.bf16 %v1046
  %v1303 = vunpack.c.l.bf16 %v1047
  %v1304 = vunpack.c.l.bf16 %v1048
  %v1305 = vunpack.c.l.bf16 %v1049
  %v1306 = vunpack.c.l.bf16 %v1050
  %v1307 = vunpack.c.l.bf16 %v1051
  %v1308 = vunpack.c.l.bf16 %v1052
  %v1309 = vunpack.c.l.bf16 %v1053
  %v1310 = vunpack.c.l.bf16 %v1054
  %v1311 = vunpack.c.l.bf16 %v1055
  %v1312 = vunpack.c.l.bf16 %v1056
  %v1313 = vunpack.c.l.bf16 %v1057
  %v1314 = vunpack.c.l.bf16 %v1058
  %v1315 = vunpack.c.l.bf16 %v1059
  %v1316 = vunpack.c.l.bf16 %v1060
  %v1317 = vunpack.c.l.bf16 %v1061
  %v1318 = vunpack.c.l.bf16 %v1062
  %v1319 = vunpack.c.l.bf16 %v1063
  %v1320 = vunpack.c.l.bf16 %v1064
  %v1321 = vunpack.c.l.bf16 %v1065
  %v1322 = vunpack.c.l.bf16 %v1066
  %v1323 = vunpack.c.l.bf16 %v1067
  %v1324 = vunpack.c.l.bf16 %v1068
  %v1325 = vunpack.c.l.bf16 %v1069
  %v1326 = vunpack.c.l.bf16 %v1070
  %v1327 = vunpack.c.l.bf16 %v1071
  %v1328 = vunpack.c.l.bf16 %v1072
  %v1329 = vunpack.c.l.bf16 %v1073
  %v1330 = vunpack.c.l.bf16 %v1074
  %v1331 = vunpack.c.l.bf16 %v1267
  %v1332 = vunpack.c.l.bf16 %v1268
  %v1333 = vunpack.c.l.bf16 %v1269
  %v1334 = vunpack.c.l.bf16 %v1270
  %v1335 = vunpack.c.l.bf16 %v1271
  %v1336 = vunpack.c.l.bf16 %v1272
  %v1337 = vunpack.c.l.bf16 %v1273
  %v1338 = vunpack.c.l.bf16 %v1274
  %v1339 = vunpack.c.l.bf16 %v1275
  %v1340 = vunpack.c.l.bf16 %v1276
  %v1341 = vunpack.c.l.bf16 %v1277
  %v1342 = vunpack.c.l.bf16 %v1278
  %v1343 = vunpack.c.l.bf16 %v1279
  %v1344 = vunpack.c.l.bf16 %v1280
  %v1345 = vunpack.c.l.bf16 %v1281
  %v1346 = vunpack.c.l.bf16 %v1282
  %v1347 = vunpack.c.l.bf16 %v1283
  %v1348 = vunpack.c.l.bf16 %v1284
  %v1349 = vunpack.c.l.bf16 %v1285
  %v1350 = vunpack.c.l.bf16 %v1286
  %v1351 = vunpack.c.l.bf16 %v1287
  %v1352 = vunpack.c.l.bf16 %v1288
  %v1353 = vunpack.c.l.bf16 %v1289
  %v1354 = vunpack.c.l.bf16 %v1290
  %v1355 = vunpack.c.l.bf16 %v1291
  %v1356 = vunpack.c.l.bf16 %v1292
  %v1357 = vunpack.c.l.bf16 %v1293
  %v1358 = vunpack.c.l.bf16 %v1294
  %v1359 = vunpack.c.l.bf16 %v1295
  %v1360 = vunpack.c.l.bf16 %v1296
  %v1361 = vunpack.c.l.bf16 %v1297
  %v1362 = vunpack.c.l.bf16 %v1298
  %v1363 = vadd.f32 %v1299, %v1331
  %v1364 = vadd.f32 %v1300, %v1332
  %v1365 = vadd.f32 %v1301, %v1333
  %v1366 = vadd.f32 %v1302, %v1334
  %v1367 = vadd.f32 %v1303, %v1335
  %v1368 = vadd.f32 %v1304, %v1336
  %v1369 = vadd.f32 %v1305, %v1337
  %v1370 = vadd.f32 %v1306, %v1338
  %v1371 = vadd.f32 %v1307, %v1339
  %v1372 = vadd.f32 %v1308, %v1340
  %v1373 = vadd.f32 %v1309, %v1341
  %v1374 = vadd.f32 %v1310, %v1342
  %v1375 = vadd.f32 %v1311, %v1343
  %v1376 = vadd.f32 %v1312, %v1344
  %v1377 = vadd.f32 %v1313, %v1345
  %v1378 = vadd.f32 %v1314, %v1346
  %v1379 = vadd.f32 %v1315, %v1347
  %v1380 = vadd.f32 %v1316, %v1348
  %v1381 = vadd.f32 %v1317, %v1349
  %v1382 = vadd.f32 %v1318, %v1350
  %v1383 = vadd.f32 %v1319, %v1351
  %v1384 = vadd.f32 %v1320, %v1352
  %v1385 = vadd.f32 %v1321, %v1353
  %v1386 = vadd.f32 %v1322, %v1354
  %v1387 = vadd.f32 %v1323, %v1355
  %v1388 = vadd.f32 %v1324, %v1356
  %v1389 = vadd.f32 %v1325, %v1357
  %v1390 = vadd.f32 %v1326, %v1358
  %v1391 = vadd.f32 %v1327, %v1359
  %v1392 = vadd.f32 %v1328, %v1360
  %v1393 = vadd.f32 %v1329, %v1361
  %v1394 = vadd.f32 %v1330, %v1362
  %v1395 = vpack.c.bf16 %v1363, %v1363
  %v1396 = vpack.c.bf16 %v1364, %v1364
  %v1397 = vpack.c.bf16 %v1365, %v1365
  %v1398 = vpack.c.bf16 %v1366, %v1366
  %v1399 = vpack.c.bf16 %v1367, %v1367
  %v1400 = vpack.c.bf16 %v1368, %v1368
  %v1401 = vpack.c.bf16 %v1369, %v1369
  %v1402 = vpack.c.bf16 %v1370, %v1370
  %v1403 = vpack.c.bf16 %v1371, %v1371
  %v1404 = vpack.c.bf16 %v1372, %v1372
  %v1405 = vpack.c.bf16 %v1373, %v1373
  %v1406 = vpack.c.bf16 %v1374, %v1374
  %v1407 = vpack.c.bf16 %v1375, %v1375
  %v1408 = vpack.c.bf16 %v1376, %v1376
  %v1409 = vpack.c.bf16 %v1377, %v1377
  %v1410 = vpack.c.bf16 %v1378, %v1378
  %v1411 = vpack.c.bf16 %v1379, %v1379
  %v1412 = vpack.c.bf16 %v1380, %v1380
  %v1413 = vpack.c.bf16 %v1381, %v1381
  %v1414 = vpack.c.bf16 %v1382, %v1382
  %v1415 = vpack.c.bf16 %v1383, %v1383
  %v1416 = vpack.c.bf16 %v1384, %v1384
  %v1417 = vpack.c.bf16 %v1385, %v1385
  %v1418 = vpack.c.bf16 %v1386, %v1386
  %v1419 = vpack.c.bf16 %v1387, %v1387
  %v1420 = vpack.c.bf16 %v1388, %v1388
  %v1421 = vpack.c.bf16 %v1389, %v1389
  %v1422 = vpack.c.bf16 %v1390, %v1390
  %v1423 = vpack.c.bf16 %v1391, %v1391
  %v1424 = vpack.c.bf16 %v1392, %v1392
  %v1425 = vpack.c.bf16 %v1393, %v1393
  %v1426 = vpack.c.bf16 %v1394, %v1394
  %1427 = vset.pattern.permute.xlu0 4
  %1428 = vperm.xlu0 %1427, %v17
  %v1429 = vpop.permute.xlu0 %1428
  %1430 = vset.pattern.permute.xlu0 4
  %1431 = vperm.xlu0 %1430, %v18
  %v1432 = vpop.permute.xlu0 %1431
  %1433 = vset.pattern.permute.xlu0 4
  %1434 = vperm.xlu0 %1433, %v19
  %v1435 = vpop.permute.xlu0 %1434
  %1436 = vset.pattern.permute.xlu0 4
  %1437 = vperm.xlu0 %1436, %v20
  %v1438 = vpop.permute.xlu0 %1437
  %1439 = vset.pattern.permute.xlu0 4
  %1440 = vperm.xlu0 %1439, %v21
  %v1441 = vpop.permute.xlu0 %1440
  %1442 = vset.pattern.permute.xlu0 4
  %1443 = vperm.xlu0 %1442, %v22
  %v1444 = vpop.permute.xlu0 %1443
  %1445 = vset.pattern.permute.xlu0 4
  %1446 = vperm.xlu0 %1445, %v23
  %v1447 = vpop.permute.xlu0 %1446
  %1448 = vset.pattern.permute.xlu0 4
  %1449 = vperm.xlu0 %1448, %v24
  %v1450 = vpop.permute.xlu0 %1449
  %1451 = vset.pattern.permute.xlu0 4
  %1452 = vperm.xlu0 %1451, %v25
  %v1453 = vpop.permute.xlu0 %1452
  %1454 = vset.pattern.permute.xlu0 4
  %1455 = vperm.xlu0 %1454, %v26
  %v1456 = vpop.permute.xlu0 %1455
  %1457 = vset.pattern.permute.xlu0 4
  %1458 = vperm.xlu0 %1457, %v27
  %v1459 = vpop.permute.xlu0 %1458
  %1460 = vset.pattern.permute.xlu0 4
  %1461 = vperm.xlu0 %1460, %v28
  %v1462 = vpop.permute.xlu0 %1461
  %1463 = vset.pattern.permute.xlu0 4
  %1464 = vperm.xlu0 %1463, %v29
  %v1465 = vpop.permute.xlu0 %1464
  %1466 = vset.pattern.permute.xlu0 4
  %1467 = vperm.xlu0 %1466, %v30
  %v1468 = vpop.permute.xlu0 %1467
  %1469 = vset.pattern.permute.xlu0 4
  %1470 = vperm.xlu0 %1469, %v31
  %v1471 = vpop.permute.xlu0 %1470
  %1472 = vset.pattern.permute.xlu0 4
  %1473 = vperm.xlu0 %1472, %v32
  %v1474 = vpop.permute.xlu0 %1473
  %1475 = vset.pattern.permute.xlu0 4
  %1476 = vperm.xlu0 %1475, %v33
  %v1477 = vpop.permute.xlu0 %1476
  %1478 = vset.pattern.permute.xlu0 4
  %1479 = vperm.xlu0 %1478, %v34
  %v1480 = vpop.permute.xlu0 %1479
  %1481 = vset.pattern.permute.xlu0 4
  %1482 = vperm.xlu0 %1481, %v35
  %v1483 = vpop.permute.xlu0 %1482
  %1484 = vset.pattern.permute.xlu0 4
  %1485 = vperm.xlu0 %1484, %v36
  %v1486 = vpop.permute.xlu0 %1485
  %1487 = vset.pattern.permute.xlu0 4
  %1488 = vperm.xlu0 %1487, %v37
  %v1489 = vpop.permute.xlu0 %1488
  %1490 = vset.pattern.permute.xlu0 4
  %1491 = vperm.xlu0 %1490, %v38
  %v1492 = vpop.permute.xlu0 %1491
  %1493 = vset.pattern.permute.xlu0 4
  %1494 = vperm.xlu0 %1493, %v39
  %v1495 = vpop.permute.xlu0 %1494
  %1496 = vset.pattern.permute.xlu0 4
  %1497 = vperm.xlu0 %1496, %v40
  %v1498 = vpop.permute.xlu0 %1497
  %1499 = vset.pattern.permute.xlu0 4
  %1500 = vperm.xlu0 %1499, %v41
  %v1501 = vpop.permute.xlu0 %1500
  %1502 = vset.pattern.permute.xlu0 4
  %1503 = vperm.xlu0 %1502, %v42
  %v1504 = vpop.permute.xlu0 %1503
  %1505 = vset.pattern.permute.xlu0 4
  %1506 = vperm.xlu0 %1505, %v43
  %v1507 = vpop.permute.xlu0 %1506
  %1508 = vset.pattern.permute.xlu0 4
  %1509 = vperm.xlu0 %1508, %v44
  %v1510 = vpop.permute.xlu0 %1509
  %1511 = vset.pattern.permute.xlu0 4
  %1512 = vperm.xlu0 %1511, %v45
  %v1513 = vpop.permute.xlu0 %1512
  %1514 = vset.pattern.permute.xlu0 4
  %1515 = vperm.xlu0 %1514, %v46
  %v1516 = vpop.permute.xlu0 %1515
  %1517 = vset.pattern.permute.xlu0 4
  %1518 = vperm.xlu0 %1517, %v47
  %v1519 = vpop.permute.xlu0 %1518
  %1520 = vset.pattern.permute.xlu0 4
  %1521 = vperm.xlu0 %1520, %v48
  %v1522 = vpop.permute.xlu0 %1521
  %vm1523 = vcmp.eq.s32.totalorder %v50, %v1429
  %vm1524 = vcmp.eq.s32.totalorder %v50, %v1432
  %vm1525 = vcmp.eq.s32.totalorder %v50, %v1435
  %vm1526 = vcmp.eq.s32.totalorder %v50, %v1438
  %vm1527 = vcmp.eq.s32.totalorder %v50, %v1441
  %vm1528 = vcmp.eq.s32.totalorder %v50, %v1444
  %vm1529 = vcmp.eq.s32.totalorder %v50, %v1447
  %vm1530 = vcmp.eq.s32.totalorder %v50, %v1450
  %vm1531 = vcmp.eq.s32.totalorder %v50, %v1453
  %vm1532 = vcmp.eq.s32.totalorder %v50, %v1456
  %vm1533 = vcmp.eq.s32.totalorder %v50, %v1459
  %vm1534 = vcmp.eq.s32.totalorder %v50, %v1462
  %vm1535 = vcmp.eq.s32.totalorder %v50, %v1465
  %vm1536 = vcmp.eq.s32.totalorder %v50, %v1468
  %vm1537 = vcmp.eq.s32.totalorder %v50, %v1471
  %vm1538 = vcmp.eq.s32.totalorder %v50, %v1474
  %vm1539 = vcmp.eq.s32.totalorder %v50, %v1477
  %vm1540 = vcmp.eq.s32.totalorder %v50, %v1480
  %vm1541 = vcmp.eq.s32.totalorder %v50, %v1483
  %vm1542 = vcmp.eq.s32.totalorder %v50, %v1486
  %vm1543 = vcmp.eq.s32.totalorder %v50, %v1489
  %vm1544 = vcmp.eq.s32.totalorder %v50, %v1492
  %vm1545 = vcmp.eq.s32.totalorder %v50, %v1495
  %vm1546 = vcmp.eq.s32.totalorder %v50, %v1498
  %vm1547 = vcmp.eq.s32.totalorder %v50, %v1501
  %vm1548 = vcmp.eq.s32.totalorder %v50, %v1504
  %vm1549 = vcmp.eq.s32.totalorder %v50, %v1507
  %vm1550 = vcmp.eq.s32.totalorder %v50, %v1510
  %vm1551 = vcmp.eq.s32.totalorder %v50, %v1513
  %vm1552 = vcmp.eq.s32.totalorder %v50, %v1516
  %vm1553 = vcmp.eq.s32.totalorder %v50, %v1519
  %vm1554 = vcmp.eq.s32.totalorder %v50, %v1522
  %v1555 = vsel %vm1523, 1, 0
  %v1556 = vsel %vm1524, 1, 0
  %v1557 = vsel %vm1525, 1, 0
  %v1558 = vsel %vm1526, 1, 0
  %v1559 = vsel %vm1527, 1, 0
  %v1560 = vsel %vm1528, 1, 0
  %v1561 = vsel %vm1529, 1, 0
  %v1562 = vsel %vm1530, 1, 0
  %v1563 = vsel %vm1531, 1, 0
  %v1564 = vsel %vm1532, 1, 0
  %v1565 = vsel %vm1533, 1, 0
  %v1566 = vsel %vm1534, 1, 0
  %v1567 = vsel %vm1535, 1, 0
  %v1568 = vsel %vm1536, 1, 0
  %v1569 = vsel %vm1537, 1, 0
  %v1570 = vsel %vm1538, 1, 0
  %v1571 = vsel %vm1539, 1, 0
  %v1572 = vsel %vm1540, 1, 0
  %v1573 = vsel %vm1541, 1, 0
  %v1574 = vsel %vm1542, 1, 0
  %v1575 = vsel %vm1543, 1, 0
  %v1576 = vsel %vm1544, 1, 0
  %v1577 = vsel %vm1545, 1, 0
  %v1578 = vsel %vm1546, 1, 0
  %v1579 = vsel %vm1547, 1, 0
  %v1580 = vsel %vm1548, 1, 0
  %v1581 = vsel %vm1549, 1, 0
  %v1582 = vsel %vm1550, 1, 0
  %v1583 = vsel %vm1551, 1, 0
  %v1584 = vsel %vm1552, 1, 0
  %v1585 = vsel %vm1553, 1, 0
  %v1586 = vsel %vm1554, 1, 0
  %v1587 = vcvt.s32.f32 %v1555
  %v1588 = vcvt.s32.f32 %v1556
  %v1589 = vcvt.s32.f32 %v1557
  %v1590 = vcvt.s32.f32 %v1558
  %v1591 = vcvt.s32.f32 %v1559
  %v1592 = vcvt.s32.f32 %v1560
  %v1593 = vcvt.s32.f32 %v1561
  %v1594 = vcvt.s32.f32 %v1562
  %v1595 = vcvt.s32.f32 %v1563
  %v1596 = vcvt.s32.f32 %v1564
  %v1597 = vcvt.s32.f32 %v1565
  %v1598 = vcvt.s32.f32 %v1566
  %v1599 = vcvt.s32.f32 %v1567
  %v1600 = vcvt.s32.f32 %v1568
  %v1601 = vcvt.s32.f32 %v1569
  %v1602 = vcvt.s32.f32 %v1570
  %v1603 = vcvt.s32.f32 %v1571
  %v1604 = vcvt.s32.f32 %v1572
  %v1605 = vcvt.s32.f32 %v1573
  %v1606 = vcvt.s32.f32 %v1574
  %v1607 = vcvt.s32.f32 %v1575
  %v1608 = vcvt.s32.f32 %v1576
  %v1609 = vcvt.s32.f32 %v1577
  %v1610 = vcvt.s32.f32 %v1578
  %v1611 = vcvt.s32.f32 %v1579
  %v1612 = vcvt.s32.f32 %v1580
  %v1613 = vcvt.s32.f32 %v1581
  %v1614 = vcvt.s32.f32 %v1582
  %v1615 = vcvt.s32.f32 %v1583
  %v1616 = vcvt.s32.f32 %v1584
  %v1617 = vcvt.s32.f32 %v1585
  %v1618 = vcvt.s32.f32 %v1586
  %v1619 = vpack.c.bf16 %v1587, %v1587
  %v1620 = vpack.c.bf16 %v1588, %v1588
  %v1621 = vpack.c.bf16 %v1589, %v1589
  %v1622 = vpack.c.bf16 %v1590, %v1590
  %v1623 = vpack.c.bf16 %v1591, %v1591
  %v1624 = vpack.c.bf16 %v1592, %v1592
  %v1625 = vpack.c.bf16 %v1593, %v1593
  %v1626 = vpack.c.bf16 %v1594, %v1594
  %v1627 = vpack.c.bf16 %v1595, %v1595
  %v1628 = vpack.c.bf16 %v1596, %v1596
  %v1629 = vpack.c.bf16 %v1597, %v1597
  %v1630 = vpack.c.bf16 %v1598, %v1598
  %v1631 = vpack.c.bf16 %v1599, %v1599
  %v1632 = vpack.c.bf16 %v1600, %v1600
  %v1633 = vpack.c.bf16 %v1601, %v1601
  %v1634 = vpack.c.bf16 %v1602, %v1602
  %v1635 = vpack.c.bf16 %v1603, %v1603
  %v1636 = vpack.c.bf16 %v1604, %v1604
  %v1637 = vpack.c.bf16 %v1605, %v1605
  %v1638 = vpack.c.bf16 %v1606, %v1606
  %v1639 = vpack.c.bf16 %v1607, %v1607
  %v1640 = vpack.c.bf16 %v1608, %v1608
  %v1641 = vpack.c.bf16 %v1609, %v1609
  %v1642 = vpack.c.bf16 %v1610, %v1610
  %v1643 = vpack.c.bf16 %v1611, %v1611
  %v1644 = vpack.c.bf16 %v1612, %v1612
  %v1645 = vpack.c.bf16 %v1613, %v1613
  %v1646 = vpack.c.bf16 %v1614, %v1614
  %v1647 = vpack.c.bf16 %v1615, %v1615
  %v1648 = vpack.c.bf16 %v1616, %v1616
  %v1649 = vpack.c.bf16 %v1617, %v1617
  %v1650 = vpack.c.bf16 %v1618, %v1618
  %v1651 = vunpack.c.l.bf16 %v1395
  %v1652 = vunpack.c.l.bf16 %v1396
  %v1653 = vunpack.c.l.bf16 %v1397
  %v1654 = vunpack.c.l.bf16 %v1398
  %v1655 = vunpack.c.l.bf16 %v1399
  %v1656 = vunpack.c.l.bf16 %v1400
  %v1657 = vunpack.c.l.bf16 %v1401
  %v1658 = vunpack.c.l.bf16 %v1402
  %v1659 = vunpack.c.l.bf16 %v1403
  %v1660 = vunpack.c.l.bf16 %v1404
  %v1661 = vunpack.c.l.bf16 %v1405
  %v1662 = vunpack.c.l.bf16 %v1406
  %v1663 = vunpack.c.l.bf16 %v1407
  %v1664 = vunpack.c.l.bf16 %v1408
  %v1665 = vunpack.c.l.bf16 %v1409
  %v1666 = vunpack.c.l.bf16 %v1410
  %v1667 = vunpack.c.l.bf16 %v1411
  %v1668 = vunpack.c.l.bf16 %v1412
  %v1669 = vunpack.c.l.bf16 %v1413
  %v1670 = vunpack.c.l.bf16 %v1414
  %v1671 = vunpack.c.l.bf16 %v1415
  %v1672 = vunpack.c.l.bf16 %v1416
  %v1673 = vunpack.c.l.bf16 %v1417
  %v1674 = vunpack.c.l.bf16 %v1418
  %v1675 = vunpack.c.l.bf16 %v1419
  %v1676 = vunpack.c.l.bf16 %v1420
  %v1677 = vunpack.c.l.bf16 %v1421
  %v1678 = vunpack.c.l.bf16 %v1422
  %v1679 = vunpack.c.l.bf16 %v1423
  %v1680 = vunpack.c.l.bf16 %v1424
  %v1681 = vunpack.c.l.bf16 %v1425
  %v1682 = vunpack.c.l.bf16 %v1426
  %v1683 = vunpack.c.l.bf16 %v1619
  %v1684 = vunpack.c.l.bf16 %v1620
  %v1685 = vunpack.c.l.bf16 %v1621
  %v1686 = vunpack.c.l.bf16 %v1622
  %v1687 = vunpack.c.l.bf16 %v1623
  %v1688 = vunpack.c.l.bf16 %v1624
  %v1689 = vunpack.c.l.bf16 %v1625
  %v1690 = vunpack.c.l.bf16 %v1626
  %v1691 = vunpack.c.l.bf16 %v1627
  %v1692 = vunpack.c.l.bf16 %v1628
  %v1693 = vunpack.c.l.bf16 %v1629
  %v1694 = vunpack.c.l.bf16 %v1630
  %v1695 = vunpack.c.l.bf16 %v1631
  %v1696 = vunpack.c.l.bf16 %v1632
  %v1697 = vunpack.c.l.bf16 %v1633
  %v1698 = vunpack.c.l.bf16 %v1634
  %v1699 = vunpack.c.l.bf16 %v1635
  %v1700 = vunpack.c.l.bf16 %v1636
  %v1701 = vunpack.c.l.bf16 %v1637
  %v1702 = vunpack.c.l.bf16 %v1638
  %v1703 = vunpack.c.l.bf16 %v1639
  %v1704 = vunpack.c.l.bf16 %v1640
  %v1705 = vunpack.c.l.bf16 %v1641
  %v1706 = vunpack.c.l.bf16 %v1642
  %v1707 = vunpack.c.l.bf16 %v1643
  %v1708 = vunpack.c.l.bf16 %v1644
  %v1709 = vunpack.c.l.bf16 %v1645
  %v1710 = vunpack.c.l.bf16 %v1646
  %v1711 = vunpack.c.l.bf16 %v1647
  %v1712 = vunpack.c.l.bf16 %v1648
  %v1713 = vunpack.c.l.bf16 %v1649
  %v1714 = vunpack.c.l.bf16 %v1650
  %v1715 = vadd.f32 %v1651, %v1683
  %v1716 = vadd.f32 %v1652, %v1684
  %v1717 = vadd.f32 %v1653, %v1685
  %v1718 = vadd.f32 %v1654, %v1686
  %v1719 = vadd.f32 %v1655, %v1687
  %v1720 = vadd.f32 %v1656, %v1688
  %v1721 = vadd.f32 %v1657, %v1689
  %v1722 = vadd.f32 %v1658, %v1690
  %v1723 = vadd.f32 %v1659, %v1691
  %v1724 = vadd.f32 %v1660, %v1692
  %v1725 = vadd.f32 %v1661, %v1693
  %v1726 = vadd.f32 %v1662, %v1694
  %v1727 = vadd.f32 %v1663, %v1695
  %v1728 = vadd.f32 %v1664, %v1696
  %v1729 = vadd.f32 %v1665, %v1697
  %v1730 = vadd.f32 %v1666, %v1698
  %v1731 = vadd.f32 %v1667, %v1699
  %v1732 = vadd.f32 %v1668, %v1700
  %v1733 = vadd.f32 %v1669, %v1701
  %v1734 = vadd.f32 %v1670, %v1702
  %v1735 = vadd.f32 %v1671, %v1703
  %v1736 = vadd.f32 %v1672, %v1704
  %v1737 = vadd.f32 %v1673, %v1705
  %v1738 = vadd.f32 %v1674, %v1706
  %v1739 = vadd.f32 %v1675, %v1707
  %v1740 = vadd.f32 %v1676, %v1708
  %v1741 = vadd.f32 %v1677, %v1709
  %v1742 = vadd.f32 %v1678, %v1710
  %v1743 = vadd.f32 %v1679, %v1711
  %v1744 = vadd.f32 %v1680, %v1712
  %v1745 = vadd.f32 %v1681, %v1713
  %v1746 = vadd.f32 %v1682, %v1714
  %v1747 = vpack.c.bf16 %v1716, %v1715
  %v1748 = vpack.c.bf16 %v1718, %v1717
  %v1749 = vpack.c.bf16 %v1720, %v1719
  %v1750 = vpack.c.bf16 %v1722, %v1721
  %v1751 = vpack.c.bf16 %v1724, %v1723
  %v1752 = vpack.c.bf16 %v1726, %v1725
  %v1753 = vpack.c.bf16 %v1728, %v1727
  %v1754 = vpack.c.bf16 %v1730, %v1729
  %v1755 = vpack.c.bf16 %v1732, %v1731
  %v1756 = vpack.c.bf16 %v1734, %v1733
  %v1757 = vpack.c.bf16 %v1736, %v1735
  %v1758 = vpack.c.bf16 %v1738, %v1737
  %v1759 = vpack.c.bf16 %v1740, %v1739
  %v1760 = vpack.c.bf16 %v1742, %v1741
  %v1761 = vpack.c.bf16 %v1744, %v1743
  %v1762 = vpack.c.bf16 %v1746, %v1745
  %v1763 = vld [vmem:[%s1] sm:$0xf]
  %v1764 = vld [vmem:[%s1 + $0x4] sm:$0xf]
  %v1765 = vld [vmem:[%s1 + $0x8] sm:$0xf]
  %v1766 = vld [vmem:[%s1 + $0xc] sm:$0xf]
  %v1767 = vld [vmem:[%s1 + $0x10] sm:$0xf]
  %v1768 = vld [vmem:[%s1 + $0x14] sm:$0xf]
  %v1769 = vld [vmem:[%s1 + $0x18] sm:$0xf]
  %v1770 = vld [vmem:[%s1 + $0x1c] sm:$0xf]
  %v1771 = vld [vmem:[%s1 + $0x20] sm:$0xf]
  %v1772 = vld [vmem:[%s1 + $0x24] sm:$0xf]
  %v1773 = vld [vmem:[%s1 + $0x28] sm:$0xf]
  %v1774 = vld [vmem:[%s1 + $0x2c] sm:$0xf]
  %v1775 = vld [vmem:[%s1 + $0x30] sm:$0xf]
  %v1776 = vld [vmem:[%s1 + $0x34] sm:$0xf]
  %v1777 = vld [vmem:[%s1 + $0x38] sm:$0xf]
  %v1778 = vld [vmem:[%s1 + $0x3c] sm:$0xf]
  %v1795 = vunpack.c.l.b16 %v1763
  %v1796 = vunpack.c.l.b16 %v1764
  %v1797 = vunpack.c.l.b16 %v1765
  %v1798 = vunpack.c.l.b16 %v1766
  %v1799 = vunpack.c.l.b16 %v1767
  %v1800 = vunpack.c.l.b16 %v1768
  %v1801 = vunpack.c.l.b16 %v1769
  %v1802 = vunpack.c.l.b16 %v1770
  %v1803 = vunpack.c.l.b16 %v1771
  %v1804 = vunpack.c.l.b16 %v1772
  %v1805 = vunpack.c.l.b16 %v1773
  %v1806 = vunpack.c.l.b16 %v1774
  %v1807 = vunpack.c.l.b16 %v1775
  %v1808 = vunpack.c.l.b16 %v1776
  %v1809 = vunpack.c.l.b16 %v1777
  %v1810 = vunpack.c.l.b16 %v1778
  %v1811 = vpack.c.b16 %v1796, %v1795
  %v1812 = vpack.c.b16 %v1798, %v1797
  %v1813 = vpack.c.b16 %v1800, %v1799
  %v1814 = vpack.c.b16 %v1802, %v1801
  %v1815 = vpack.c.b16 %v1804, %v1803
  %v1816 = vpack.c.b16 %v1806, %v1805
  %v1817 = vpack.c.b16 %v1808, %v1807
  %v1818 = vpack.c.b16 %v1810, %v1809
  %1827 = vmatpush.bf16.msra.mxu0 %v1818
  %1828 = vmatpush.bf16.msra.mxu0 %v1817
  %1829 = vmatpush.bf16.msra.mxu0 %v1816
  %1830 = vmatpush.bf16.msra.mxu0 %v1815
  %1831 = vmatpush.bf16.msra.mxu0 %v1814
  %1832 = vmatpush.bf16.msra.mxu0 %v1813
  %1833 = vmatpush.bf16.msra.mxu0 %v1812
  %1834 = vmatpush.bf16.msra.mxu0 %v1811
  %1835 = vmatmul.bf16.gmra.mxu0 %v1747
  %v1836 = vpop.f32.mrf.mxu0
  %v1837 = vadd.f32 0.0, %v1836
  %v1838 = vpop.f32.mrf.mxu0
  %v1839 = vadd.f32 0.0, %v1838
  %1840 = vmatmul.bf16.gmra.mxu0 %v1748
  %v1841 = vpop.f32.mrf.mxu0
  %v1842 = vadd.f32 0.0, %v1841
  %v1843 = vpop.f32.mrf.mxu0
  %v1844 = vadd.f32 0.0, %v1843
  %1845 = vmatmul.bf16.gmra.mxu0 %v1749
  %v1846 = vpop.f32.mrf.mxu0
  %v1847 = vadd.f32 0.0, %v1846
  %v1848 = vpop.f32.mrf.mxu0
  %v1849 = vadd.f32 0.0, %v1848
  %1850 = vmatmul.bf16.gmra.mxu0 %v1750
  %v1851 = vpop.f32.mrf.mxu0
  %v1852 = vadd.f32 0.0, %v1851
  %v1853 = vpop.f32.mrf.mxu0
  %v1854 = vadd.f32 0.0, %v1853
  %1855 = vmatmul.bf16.gmra.mxu0 %v1751
  %v1856 = vpop.f32.mrf.mxu0
  %v1857 = vadd.f32 0.0, %v1856
  %v1858 = vpop.f32.mrf.mxu0
  %v1859 = vadd.f32 0.0, %v1858
  %1860 = vmatmul.bf16.gmra.mxu0 %v1752
  %v1861 = vpop.f32.mrf.mxu0
  %v1862 = vadd.f32 0.0, %v1861
  %v1863 = vpop.f32.mrf.mxu0
  %v1864 = vadd.f32 0.0, %v1863
  %1865 = vmatmul.bf16.gmra.mxu0 %v1753
  %v1866 = vpop.f32.mrf.mxu0
  %v1867 = vadd.f32 0.0, %v1866
  %v1868 = vpop.f32.mrf.mxu0
  %v1869 = vadd.f32 0.0, %v1868
  %1870 = vmatmul.bf16.gmra.mxu0 %v1754
  %v1871 = vpop.f32.mrf.mxu0
  %v1872 = vadd.f32 0.0, %v1871
  %v1873 = vpop.f32.mrf.mxu0
  %v1874 = vadd.f32 0.0, %v1873
  %1875 = vmatmul.bf16.gmra.mxu0 %v1755
  %v1876 = vpop.f32.mrf.mxu0
  %v1877 = vadd.f32 0.0, %v1876
  %v1878 = vpop.f32.mrf.mxu0
  %v1879 = vadd.f32 0.0, %v1878
  %1880 = vmatmul.bf16.gmra.mxu0 %v1756
  %v1881 = vpop.f32.mrf.mxu0
  %v1882 = vadd.f32 0.0, %v1881
  %v1883 = vpop.f32.mrf.mxu0
  %v1884 = vadd.f32 0.0, %v1883
  %1885 = vmatmul.bf16.gmra.mxu0 %v1757
  %v1886 = vpop.f32.mrf.mxu0
  %v1887 = vadd.f32 0.0, %v1886
  %v1888 = vpop.f32.mrf.mxu0
  %v1889 = vadd.f32 0.0, %v1888
  %1890 = vmatmul.bf16.gmra.mxu0 %v1758
  %v1891 = vpop.f32.mrf.mxu0
  %v1892 = vadd.f32 0.0, %v1891
  %v1893 = vpop.f32.mrf.mxu0
  %v1894 = vadd.f32 0.0, %v1893
  %1895 = vmatmul.bf16.gmra.mxu0 %v1759
  %v1896 = vpop.f32.mrf.mxu0
  %v1897 = vadd.f32 0.0, %v1896
  %v1898 = vpop.f32.mrf.mxu0
  %v1899 = vadd.f32 0.0, %v1898
  %1900 = vmatmul.bf16.gmra.mxu0 %v1760
  %v1901 = vpop.f32.mrf.mxu0
  %v1902 = vadd.f32 0.0, %v1901
  %v1903 = vpop.f32.mrf.mxu0
  %v1904 = vadd.f32 0.0, %v1903
  %1905 = vmatmul.bf16.gmra.mxu0 %v1761
  %v1906 = vpop.f32.mrf.mxu0
  %v1907 = vadd.f32 0.0, %v1906
  %v1908 = vpop.f32.mrf.mxu0
  %v1909 = vadd.f32 0.0, %v1908
  %1910 = vmatmul.bf16.gmra.mxu0 %v1762
  %v1911 = vpop.f32.mrf.mxu0
  %v1912 = vadd.f32 0.0, %v1911
  %v1913 = vpop.f32.mrf.mxu0
  %v1914 = vadd.f32 0.0, %v1913
  %1915 = vdwg.mxu0
  %v1916 = vmax.f32 %v1837, 0.0
  %v1917 = vmax.f32 %v1839, 0.0
  %v1918 = vmax.f32 %v1842, 0.0
  %v1919 = vmax.f32 %v1844, 0.0
  %v1920 = vmax.f32 %v1847, 0.0
  %v1921 = vmax.f32 %v1849, 0.0
  %v1922 = vmax.f32 %v1852, 0.0
  %v1923 = vmax.f32 %v1854, 0.0
  %v1924 = vmax.f32 %v1857, 0.0
  %v1925 = vmax.f32 %v1859, 0.0
  %v1926 = vmax.f32 %v1862, 0.0
  %v1927 = vmax.f32 %v1864, 0.0
  %v1928 = vmax.f32 %v1867, 0.0
  %v1929 = vmax.f32 %v1869, 0.0
  %v1930 = vmax.f32 %v1872, 0.0
  %v1931 = vmax.f32 %v1874, 0.0
  %v1932 = vmax.f32 %v1877, 0.0
  %v1933 = vmax.f32 %v1879, 0.0
  %v1934 = vmax.f32 %v1882, 0.0
  %v1935 = vmax.f32 %v1884, 0.0
  %v1936 = vmax.f32 %v1887, 0.0
  %v1937 = vmax.f32 %v1889, 0.0
  %v1938 = vmax.f32 %v1892, 0.0
  %v1939 = vmax.f32 %v1894, 0.0
  %v1940 = vmax.f32 %v1897, 0.0
  %v1941 = vmax.f32 %v1899, 0.0
  %v1942 = vmax.f32 %v1902, 0.0
  %v1943 = vmax.f32 %v1904, 0.0
  %v1944 = vmax.f32 %v1907, 0.0
  %v1945 = vmax.f32 %v1909, 0.0
  %v1946 = vmax.f32 %v1912, 0.0
  %v1947 = vmax.f32 %v1914, 0.0
  %v1948 = vpack.c.bf16 %v1917, %v1916
  %v1949 = vpack.c.bf16 %v1919, %v1918
  %v1950 = vpack.c.bf16 %v1921, %v1920
  %v1951 = vpack.c.bf16 %v1923, %v1922
  %v1952 = vpack.c.bf16 %v1925, %v1924
  %v1953 = vpack.c.bf16 %v1927, %v1926
  %v1954 = vpack.c.bf16 %v1929, %v1928
  %v1955 = vpack.c.bf16 %v1931, %v1930
  %v1956 = vpack.c.bf16 %v1933, %v1932
  %v1957 = vpack.c.bf16 %v1935, %v1934
  %v1958 = vpack.c.bf16 %v1937, %v1936
  %v1959 = vpack.c.bf16 %v1939, %v1938
  %v1960 = vpack.c.bf16 %v1941, %v1940
  %v1961 = vpack.c.bf16 %v1943, %v1942
  %v1962 = vpack.c.bf16 %v1945, %v1944
  %v1963 = vpack.c.bf16 %v1947, %v1946
  %v1964 = vld [vmem:[%s2] sm:$0xf]
  %v1965 = vld [vmem:[%s2 + $0x4] sm:$0xf]
  %v1966 = vld [vmem:[%s2 + $0x8] sm:$0xf]
  %v1967 = vld [vmem:[%s2 + $0xc] sm:$0xf]
  %v1968 = vld [vmem:[%s2 + $0x10] sm:$0xf]
  %v1969 = vld [vmem:[%s2 + $0x14] sm:$0xf]
  %v1970 = vld [vmem:[%s2 + $0x18] sm:$0xf]
  %v1971 = vld [vmem:[%s2 + $0x1c] sm:$0xf]
  %v1972 = vld [vmem:[%s2 + $0x20] sm:$0xf]
  %v1973 = vld [vmem:[%s2 + $0x24] sm:$0xf]
  %v1974 = vld [vmem:[%s2 + $0x28] sm:$0xf]
  %v1975 = vld [vmem:[%s2 + $0x2c] sm:$0xf]
  %v1976 = vld [vmem:[%s2 + $0x30] sm:$0xf]
  %v1977 = vld [vmem:[%s2 + $0x34] sm:$0xf]
  %v1978 = vld [vmem:[%s2 + $0x38] sm:$0xf]
  %v1979 = vld [vmem:[%s2 + $0x3c] sm:$0xf]
  %v1980 = vld [vmem:[%s3] sm:$0x1]
  %v1982 = vperm.slane %v1980, 0
  %v2000 = vunpack.c.l.b16 %v1964
  %v2001 = vunpack.c.l.b16 %v1965
  %v2002 = vunpack.c.l.b16 %v1966
  %v2003 = vunpack.c.l.b16 %v1967
  %v2004 = vunpack.c.l.b16 %v1968
  %v2005 = vunpack.c.l.b16 %v1969
  %v2006 = vunpack.c.l.b16 %v1970
  %v2007 = vunpack.c.l.b16 %v1971
  %v2008 = vunpack.c.l.b16 %v1972
  %v2009 = vunpack.c.l.b16 %v1973
  %v2010 = vunpack.c.l.b16 %v1974
  %v2011 = vunpack.c.l.b16 %v1975
  %v2012 = vunpack.c.l.b16 %v1976
  %v2013 = vunpack.c.l.b16 %v1977
  %v2014 = vunpack.c.l.b16 %v1978
  %v2015 = vunpack.c.l.b16 %v1979
  %v2016 = vpack.c.b16 %v2001, %v2000
  %v2017 = vpack.c.b16 %v2003, %v2002
  %v2018 = vpack.c.b16 %v2005, %v2004
  %v2019 = vpack.c.b16 %v2007, %v2006
  %v2020 = vpack.c.b16 %v2009, %v2008
  %v2021 = vpack.c.b16 %v2011, %v2010
  %v2022 = vpack.c.b16 %v2013, %v2012
  %v2023 = vpack.c.b16 %v2015, %v2014
  %2032 = vmatpush.bf16.msra.mxu0 %v2023
  %2033 = vmatpush.bf16.msra.mxu0 %v2022
  %2034 = vmatpush.bf16.msra.mxu0 %v2021
  %2035 = vmatpush.bf16.msra.mxu0 %v2020
  %2036 = vmatpush.bf16.msra.mxu0 %v2019
  %2037 = vmatpush.bf16.msra.mxu0 %v2018
  %2038 = vmatpush.bf16.msra.mxu0 %v2017
  %2039 = vmatpush.bf16.msra.mxu0 %v2016
  %2040 = vmatmul.bf16.gmra.mxu0 %v1948
  %v2041 = vpop.f32.mrf.mxu0
  %v2042 = vadd.f32 %v1982, %v2041
  %v2043 = vpop.f32.mrf.mxu0
  %v2044 = vadd.f32 %v1982, %v2043
  %2045 = vmatmul.bf16.gmra.mxu0 %v1949
  %v2046 = vpop.f32.mrf.mxu0
  %v2047 = vadd.f32 %v1982, %v2046
  %v2048 = vpop.f32.mrf.mxu0
  %v2049 = vadd.f32 %v1982, %v2048
  %2050 = vmatmul.bf16.gmra.mxu0 %v1950
  %v2051 = vpop.f32.mrf.mxu0
  %v2052 = vadd.f32 %v1982, %v2051
  %v2053 = vpop.f32.mrf.mxu0
  %v2054 = vadd.f32 %v1982, %v2053
  %2055 = vmatmul.bf16.gmra.mxu0 %v1951
  %v2056 = vpop.f32.mrf.mxu0
  %v2057 = vadd.f32 %v1982, %v2056
  %v2058 = vpop.f32.mrf.mxu0
  %v2059 = vadd.f32 %v1982, %v2058
  %2060 = vmatmul.bf16.gmra.mxu0 %v1952
  %v2061 = vpop.f32.mrf.mxu0
  %v2062 = vadd.f32 %v1982, %v2061
  %v2063 = vpop.f32.mrf.mxu0
  %v2064 = vadd.f32 %v1982, %v2063
  %2065 = vmatmul.bf16.gmra.mxu0 %v1953
  %v2066 = vpop.f32.mrf.mxu0
  %v2067 = vadd.f32 %v1982, %v2066
  %v2068 = vpop.f32.mrf.mxu0
  %v2069 = vadd.f32 %v1982, %v2068
  %2070 = vmatmul.bf16.gmra.mxu0 %v1954
  %v2071 = vpop.f32.mrf.mxu0
  %v2072 = vadd.f32 %v1982, %v2071
  %v2073 = vpop.f32.mrf.mxu0
  %v2074 = vadd.f32 %v1982, %v2073
  %2075 = vmatmul.bf16.gmra.mxu0 %v1955
  %v2076 = vpop.f32.mrf.mxu0
  %v2077 = vadd.f32 %v1982, %v2076
  %v2078 = vpop.f32.mrf.mxu0
  %v2079 = vadd.f32 %v1982, %v2078
  %2080 = vmatmul.bf16.gmra.mxu0 %v1956
  %v2081 = vpop.f32.mrf.mxu0
  %v2082 = vadd.f32 %v1982, %v2081
  %v2083 = vpop.f32.mrf.mxu0
  %v2084 = vadd.f32 %v1982, %v2083
  %2085 = vmatmul.bf16.gmra.mxu0 %v1957
  %v2086 = vpop.f32.mrf.mxu0
  %v2087 = vadd.f32 %v1982, %v2086
  %v2088 = vpop.f32.mrf.mxu0
  %v2089 = vadd.f32 %v1982, %v2088
  %2090 = vmatmul.bf16.gmra.mxu0 %v1958
  %v2091 = vpop.f32.mrf.mxu0
  %v2092 = vadd.f32 %v1982, %v2091
  %v2093 = vpop.f32.mrf.mxu0
  %v2094 = vadd.f32 %v1982, %v2093
  %2095 = vmatmul.bf16.gmra.mxu0 %v1959
  %v2096 = vpop.f32.mrf.mxu0
  %v2097 = vadd.f32 %v1982, %v2096
  %v2098 = vpop.f32.mrf.mxu0
  %v2099 = vadd.f32 %v1982, %v2098
  %2100 = vmatmul.bf16.gmra.mxu0 %v1960
  %v2101 = vpop.f32.mrf.mxu0
  %v2102 = vadd.f32 %v1982, %v2101
  %v2103 = vpop.f32.mrf.mxu0
  %v2104 = vadd.f32 %v1982, %v2103
  %2105 = vmatmul.bf16.gmra.mxu0 %v1961
  %v2106 = vpop.f32.mrf.mxu0
  %v2107 = vadd.f32 %v1982, %v2106
  %v2108 = vpop.f32.mrf.mxu0
  %v2109 = vadd.f32 %v1982, %v2108
  %2110 = vmatmul.bf16.gmra.mxu0 %v1962
  %v2111 = vpop.f32.mrf.mxu0
  %v2112 = vadd.f32 %v1982, %v2111
  %v2113 = vpop.f32.mrf.mxu0
  %v2114 = vadd.f32 %v1982, %v2113
  %2115 = vmatmul.bf16.gmra.mxu0 %v1963
  %v2116 = vpop.f32.mrf.mxu0
  %v2117 = vadd.f32 %v1982, %v2116
  %v2118 = vpop.f32.mrf.mxu0
  %v2119 = vadd.f32 %v1982, %v2118
  %2120 = vdwg.mxu0
  %vm2121 = vcmp.lt.s32.totalorder %v50, 16
  %v2122 = vsel %vm2121, %v2042, -3.4028235e+38
  %v2123 = vsel %vm2121, %v2044, -3.4028235e+38
  %v2124 = vsel %vm2121, %v2047, -3.4028235e+38
  %v2125 = vsel %vm2121, %v2049, -3.4028235e+38
  %v2126 = vsel %vm2121, %v2052, -3.4028235e+38
  %v2127 = vsel %vm2121, %v2054, -3.4028235e+38
  %v2128 = vsel %vm2121, %v2057, -3.4028235e+38
  %v2129 = vsel %vm2121, %v2059, -3.4028235e+38
  %v2130 = vsel %vm2121, %v2062, -3.4028235e+38
  %v2131 = vsel %vm2121, %v2064, -3.4028235e+38
  %v2132 = vsel %vm2121, %v2067, -3.4028235e+38
  %v2133 = vsel %vm2121, %v2069, -3.4028235e+38
  %v2134 = vsel %vm2121, %v2072, -3.4028235e+38
  %v2135 = vsel %vm2121, %v2074, -3.4028235e+38
  %v2136 = vsel %vm2121, %v2077, -3.4028235e+38
  %v2137 = vsel %vm2121, %v2079, -3.4028235e+38
  %v2138 = vsel %vm2121, %v2082, -3.4028235e+38
  %v2139 = vsel %vm2121, %v2084, -3.4028235e+38
  %v2140 = vsel %vm2121, %v2087, -3.4028235e+38
  %v2141 = vsel %vm2121, %v2089, -3.4028235e+38
  %v2142 = vsel %vm2121, %v2092, -3.4028235e+38
  %v2143 = vsel %vm2121, %v2094, -3.4028235e+38
  %v2144 = vsel %vm2121, %v2097, -3.4028235e+38
  %v2145 = vsel %vm2121, %v2099, -3.4028235e+38
  %v2146 = vsel %vm2121, %v2102, -3.4028235e+38
  %v2147 = vsel %vm2121, %v2104, -3.4028235e+38
  %v2148 = vsel %vm2121, %v2107, -3.4028235e+38
  %v2149 = vsel %vm2121, %v2109, -3.4028235e+38
  %v2150 = vsel %vm2121, %v2112, -3.4028235e+38
  %v2151 = vsel %vm2121, %v2114, -3.4028235e+38
  %v2152 = vsel %vm2121, %v2117, -3.4028235e+38
  %v2153 = vsel %vm2121, %v2119, -3.4028235e+38
  %2154 = vmax.xlane.f32.xlu0 %v2122
  %v2155 = vpop.xlane.xlu0 %2154
  %2156 = vmax.xlane.f32.xlu0 %v2123
  %v2157 = vpop.xlane.xlu0 %2156
  %2158 = vmax.xlane.f32.xlu0 %v2124
  %v2159 = vpop.xlane.xlu0 %2158
  %2160 = vmax.xlane.f32.xlu0 %v2125
  %v2161 = vpop.xlane.xlu0 %2160
  %2162 = vmax.xlane.f32.xlu0 %v2126
  %v2163 = vpop.xlane.xlu0 %2162
  %2164 = vmax.xlane.f32.xlu0 %v2127
  %v2165 = vpop.xlane.xlu0 %2164
  %2166 = vmax.xlane.f32.xlu0 %v2128
  %v2167 = vpop.xlane.xlu0 %2166
  %2168 = vmax.xlane.f32.xlu0 %v2129
  %v2169 = vpop.xlane.xlu0 %2168
  %2170 = vmax.xlane.f32.xlu0 %v2130
  %v2171 = vpop.xlane.xlu0 %2170
  %2172 = vmax.xlane.f32.xlu0 %v2131
  %v2173 = vpop.xlane.xlu0 %2172
  %2174 = vmax.xlane.f32.xlu0 %v2132
  %v2175 = vpop.xlane.xlu0 %2174
  %2176 = vmax.xlane.f32.xlu0 %v2133
  %v2177 = vpop.xlane.xlu0 %2176
  %2178 = vmax.xlane.f32.xlu0 %v2134
  %v2179 = vpop.xlane.xlu0 %2178
  %2180 = vmax.xlane.f32.xlu0 %v2135
  %v2181 = vpop.xlane.xlu0 %2180
  %2182 = vmax.xlane.f32.xlu0 %v2136
  %v2183 = vpop.xlane.xlu0 %2182
  %2184 = vmax.xlane.f32.xlu0 %v2137
  %v2185 = vpop.xlane.xlu0 %2184
  %2186 = vmax.xlane.f32.xlu0 %v2138
  %v2187 = vpop.xlane.xlu0 %2186
  %2188 = vmax.xlane.f32.xlu0 %v2139
  %v2189 = vpop.xlane.xlu0 %2188
  %2190 = vmax.xlane.f32.xlu0 %v2140
  %v2191 = vpop.xlane.xlu0 %2190
  %2192 = vmax.xlane.f32.xlu0 %v2141
  %v2193 = vpop.xlane.xlu0 %2192
  %2194 = vmax.xlane.f32.xlu0 %v2142
  %v2195 = vpop.xlane.xlu0 %2194
  %2196 = vmax.xlane.f32.xlu0 %v2143
  %v2197 = vpop.xlane.xlu0 %2196
  %2198 = vmax.xlane.f32.xlu0 %v2144
  %v2199 = vpop.xlane.xlu0 %2198
  %2200 = vmax.xlane.f32.xlu0 %v2145
  %v2201 = vpop.xlane.xlu0 %2200
  %2202 = vmax.xlane.f32.xlu0 %v2146
  %v2203 = vpop.xlane.xlu0 %2202
  %2204 = vmax.xlane.f32.xlu0 %v2147
  %v2205 = vpop.xlane.xlu0 %2204
  %2206 = vmax.xlane.f32.xlu0 %v2148
  %v2207 = vpop.xlane.xlu0 %2206
  %2208 = vmax.xlane.f32.xlu0 %v2149
  %v2209 = vpop.xlane.xlu0 %2208
  %2210 = vmax.xlane.f32.xlu0 %v2150
  %v2211 = vpop.xlane.xlu0 %2210
  %2212 = vmax.xlane.f32.xlu0 %v2151
  %v2213 = vpop.xlane.xlu0 %2212
  %2214 = vmax.xlane.f32.xlu0 %v2152
  %v2215 = vpop.xlane.xlu0 %2214
  %2216 = vmax.xlane.f32.xlu0 %v2153
  %v2217 = vpop.xlane.xlu0 %2216
  %v2218 = vsub.f32 %v2122, %v2155
  %v2219 = vsub.f32 %v2123, %v2157
  %v2220 = vsub.f32 %v2124, %v2159
  %v2221 = vsub.f32 %v2125, %v2161
  %v2222 = vsub.f32 %v2126, %v2163
  %v2223 = vsub.f32 %v2127, %v2165
  %v2224 = vsub.f32 %v2128, %v2167
  %v2225 = vsub.f32 %v2129, %v2169
  %v2226 = vsub.f32 %v2130, %v2171
  %v2227 = vsub.f32 %v2131, %v2173
  %v2228 = vsub.f32 %v2132, %v2175
  %v2229 = vsub.f32 %v2133, %v2177
  %v2230 = vsub.f32 %v2134, %v2179
  %v2231 = vsub.f32 %v2135, %v2181
  %v2232 = vsub.f32 %v2136, %v2183
  %v2233 = vsub.f32 %v2137, %v2185
  %v2234 = vsub.f32 %v2138, %v2187
  %v2235 = vsub.f32 %v2139, %v2189
  %v2236 = vsub.f32 %v2140, %v2191
  %v2237 = vsub.f32 %v2141, %v2193
  %v2238 = vsub.f32 %v2142, %v2195
  %v2239 = vsub.f32 %v2143, %v2197
  %v2240 = vsub.f32 %v2144, %v2199
  %v2241 = vsub.f32 %v2145, %v2201
  %v2242 = vsub.f32 %v2146, %v2203
  %v2243 = vsub.f32 %v2147, %v2205
  %v2244 = vsub.f32 %v2148, %v2207
  %v2245 = vsub.f32 %v2149, %v2209
  %v2246 = vsub.f32 %v2150, %v2211
  %v2247 = vsub.f32 %v2151, %v2213
  %v2248 = vsub.f32 %v2152, %v2215
  %v2249 = vsub.f32 %v2153, %v2217
  %v2250 = vmul.f32 %v2218, 1.442695
  %v2251 = vpow.pop %v2250
  %v2252 = vmul.f32 %v2219, 1.442695
  %v2253 = vpow.pop %v2252
  %v2254 = vmul.f32 %v2220, 1.442695
  %v2255 = vpow.pop %v2254
  %v2256 = vmul.f32 %v2221, 1.442695
  %v2257 = vpow.pop %v2256
  %v2258 = vmul.f32 %v2222, 1.442695
  %v2259 = vpow.pop %v2258
  %v2260 = vmul.f32 %v2223, 1.442695
  %v2261 = vpow.pop %v2260
  %v2262 = vmul.f32 %v2224, 1.442695
  %v2263 = vpow.pop %v2262
  %v2264 = vmul.f32 %v2225, 1.442695
  %v2265 = vpow.pop %v2264
  %v2266 = vmul.f32 %v2226, 1.442695
  %v2267 = vpow.pop %v2266
  %v2268 = vmul.f32 %v2227, 1.442695
  %v2269 = vpow.pop %v2268
  %v2270 = vmul.f32 %v2228, 1.442695
  %v2271 = vpow.pop %v2270
  %v2272 = vmul.f32 %v2229, 1.442695
  %v2273 = vpow.pop %v2272
  %v2274 = vmul.f32 %v2230, 1.442695
  %v2275 = vpow.pop %v2274
  %v2276 = vmul.f32 %v2231, 1.442695
  %v2277 = vpow.pop %v2276
  %v2278 = vmul.f32 %v2232, 1.442695
  %v2279 = vpow.pop %v2278
  %v2280 = vmul.f32 %v2233, 1.442695
  %v2281 = vpow.pop %v2280
  %v2282 = vmul.f32 %v2234, 1.442695
  %v2283 = vpow.pop %v2282
  %v2284 = vmul.f32 %v2235, 1.442695
  %v2285 = vpow.pop %v2284
  %v2286 = vmul.f32 %v2236, 1.442695
  %v2287 = vpow.pop %v2286
  %v2288 = vmul.f32 %v2237, 1.442695
  %v2289 = vpow.pop %v2288
  %v2290 = vmul.f32 %v2238, 1.442695
  %v2291 = vpow.pop %v2290
  %v2292 = vmul.f32 %v2239, 1.442695
  %v2293 = vpow.pop %v2292
  %v2294 = vmul.f32 %v2240, 1.442695
  %v2295 = vpow.pop %v2294
  %v2296 = vmul.f32 %v2241, 1.442695
  %v2297 = vpow.pop %v2296
  %v2298 = vmul.f32 %v2242, 1.442695
  %v2299 = vpow.pop %v2298
  %v2300 = vmul.f32 %v2243, 1.442695
  %v2301 = vpow.pop %v2300
  %v2302 = vmul.f32 %v2244, 1.442695
  %v2303 = vpow.pop %v2302
  %v2304 = vmul.f32 %v2245, 1.442695
  %v2305 = vpow.pop %v2304
  %v2306 = vmul.f32 %v2246, 1.442695
  %v2307 = vpow.pop %v2306
  %v2308 = vmul.f32 %v2247, 1.442695
  %v2309 = vpow.pop %v2308
  %v2310 = vmul.f32 %v2248, 1.442695
  %v2311 = vpow.pop %v2310
  %v2312 = vmul.f32 %v2249, 1.442695
  %v2313 = vpow.pop %v2312
  %2314 = vadd.xlane.f32.xlu0 %v2251
  %v2315 = vpop.xlane.xlu0 %2314
  %2316 = vadd.xlane.f32.xlu0 %v2253
  %v2317 = vpop.xlane.xlu0 %2316
  %2318 = vadd.xlane.f32.xlu0 %v2255
  %v2319 = vpop.xlane.xlu0 %2318
  %2320 = vadd.xlane.f32.xlu0 %v2257
  %v2321 = vpop.xlane.xlu0 %2320
  %2322 = vadd.xlane.f32.xlu0 %v2259
  %v2323 = vpop.xlane.xlu0 %2322
  %2324 = vadd.xlane.f32.xlu0 %v2261
  %v2325 = vpop.xlane.xlu0 %2324
  %2326 = vadd.xlane.f32.xlu0 %v2263
  %v2327 = vpop.xlane.xlu0 %2326
  %2328 = vadd.xlane.f32.xlu0 %v2265
  %v2329 = vpop.xlane.xlu0 %2328
  %2330 = vadd.xlane.f32.xlu0 %v2267
  %v2331 = vpop.xlane.xlu0 %2330
  %2332 = vadd.xlane.f32.xlu0 %v2269
  %v2333 = vpop.xlane.xlu0 %2332
  %2334 = vadd.xlane.f32.xlu0 %v2271
  %v2335 = vpop.xlane.xlu0 %2334
  %2336 = vadd.xlane.f32.xlu0 %v2273
  %v2337 = vpop.xlane.xlu0 %2336
  %2338 = vadd.xlane.f32.xlu0 %v2275
  %v2339 = vpop.xlane.xlu0 %2338
  %2340 = vadd.xlane.f32.xlu0 %v2277
  %v2341 = vpop.xlane.xlu0 %2340
  %2342 = vadd.xlane.f32.xlu0 %v2279
  %v2343 = vpop.xlane.xlu0 %2342
  %2344 = vadd.xlane.f32.xlu0 %v2281
  %v2345 = vpop.xlane.xlu0 %2344
  %2346 = vadd.xlane.f32.xlu0 %v2283
  %v2347 = vpop.xlane.xlu0 %2346
  %2348 = vadd.xlane.f32.xlu0 %v2285
  %v2349 = vpop.xlane.xlu0 %2348
  %2350 = vadd.xlane.f32.xlu0 %v2287
  %v2351 = vpop.xlane.xlu0 %2350
  %2352 = vadd.xlane.f32.xlu0 %v2289
  %v2353 = vpop.xlane.xlu0 %2352
  %2354 = vadd.xlane.f32.xlu0 %v2291
  %v2355 = vpop.xlane.xlu0 %2354
  %2356 = vadd.xlane.f32.xlu0 %v2293
  %v2357 = vpop.xlane.xlu0 %2356
  %2358 = vadd.xlane.f32.xlu0 %v2295
  %v2359 = vpop.xlane.xlu0 %2358
  %2360 = vadd.xlane.f32.xlu0 %v2297
  %v2361 = vpop.xlane.xlu0 %2360
  %2362 = vadd.xlane.f32.xlu0 %v2299
  %v2363 = vpop.xlane.xlu0 %2362
  %2364 = vadd.xlane.f32.xlu0 %v2301
  %v2365 = vpop.xlane.xlu0 %2364
  %2366 = vadd.xlane.f32.xlu0 %v2303
  %v2367 = vpop.xlane.xlu0 %2366
  %2368 = vadd.xlane.f32.xlu0 %v2305
  %v2369 = vpop.xlane.xlu0 %2368
  %2370 = vadd.xlane.f32.xlu0 %v2307
  %v2371 = vpop.xlane.xlu0 %2370
  %2372 = vadd.xlane.f32.xlu0 %v2309
  %v2373 = vpop.xlane.xlu0 %2372
  %2374 = vadd.xlane.f32.xlu0 %v2311
  %v2375 = vpop.xlane.xlu0 %2374
  %2376 = vadd.xlane.f32.xlu0 %v2313
  %v2377 = vpop.xlane.xlu0 %2376
  %v2378 = vlog2.pop %v2315
  %v2379 = vmul.f32 %v2378, 0.6931472
  %v2380 = vlog2.pop %v2317
  %v2381 = vmul.f32 %v2380, 0.6931472
  %v2382 = vlog2.pop %v2319
  %v2383 = vmul.f32 %v2382, 0.6931472
  %v2384 = vlog2.pop %v2321
  %v2385 = vmul.f32 %v2384, 0.6931472
  %v2386 = vlog2.pop %v2323
  %v2387 = vmul.f32 %v2386, 0.6931472
  %v2388 = vlog2.pop %v2325
  %v2389 = vmul.f32 %v2388, 0.6931472
  %v2390 = vlog2.pop %v2327
  %v2391 = vmul.f32 %v2390, 0.6931472
  %v2392 = vlog2.pop %v2329
  %v2393 = vmul.f32 %v2392, 0.6931472
  %v2394 = vlog2.pop %v2331
  %v2395 = vmul.f32 %v2394, 0.6931472
  %v2396 = vlog2.pop %v2333
  %v2397 = vmul.f32 %v2396, 0.6931472
  %v2398 = vlog2.pop %v2335
  %v2399 = vmul.f32 %v2398, 0.6931472
  %v2400 = vlog2.pop %v2337
  %v2401 = vmul.f32 %v2400, 0.6931472
  %v2402 = vlog2.pop %v2339
  %v2403 = vmul.f32 %v2402, 0.6931472
  %v2404 = vlog2.pop %v2341
  %v2405 = vmul.f32 %v2404, 0.6931472
  %v2406 = vlog2.pop %v2343
  %v2407 = vmul.f32 %v2406, 0.6931472
  %v2408 = vlog2.pop %v2345
  %v2409 = vmul.f32 %v2408, 0.6931472
  %v2410 = vlog2.pop %v2347
  %v2411 = vmul.f32 %v2410, 0.6931472
  %v2412 = vlog2.pop %v2349
  %v2413 = vmul.f32 %v2412, 0.6931472
  %v2414 = vlog2.pop %v2351
  %v2415 = vmul.f32 %v2414, 0.6931472
  %v2416 = vlog2.pop %v2353
  %v2417 = vmul.f32 %v2416, 0.6931472
  %v2418 = vlog2.pop %v2355
  %v2419 = vmul.f32 %v2418, 0.6931472
  %v2420 = vlog2.pop %v2357
  %v2421 = vmul.f32 %v2420, 0.6931472
  %v2422 = vlog2.pop %v2359
  %v2423 = vmul.f32 %v2422, 0.6931472
  %v2424 = vlog2.pop %v2361
  %v2425 = vmul.f32 %v2424, 0.6931472
  %v2426 = vlog2.pop %v2363
  %v2427 = vmul.f32 %v2426, 0.6931472
  %v2428 = vlog2.pop %v2365
  %v2429 = vmul.f32 %v2428, 0.6931472
  %v2430 = vlog2.pop %v2367
  %v2431 = vmul.f32 %v2430, 0.6931472
  %v2432 = vlog2.pop %v2369
  %v2433 = vmul.f32 %v2432, 0.6931472
  %v2434 = vlog2.pop %v2371
  %v2435 = vmul.f32 %v2434, 0.6931472
  %v2436 = vlog2.pop %v2373
  %v2437 = vmul.f32 %v2436, 0.6931472
  %v2438 = vlog2.pop %v2375
  %v2439 = vmul.f32 %v2438, 0.6931472
  %v2440 = vlog2.pop %v2377
  %v2441 = vmul.f32 %v2440, 0.6931472
  %v2442 = vadd.f32 %v2379, %v2155
  %v2443 = vadd.f32 %v2381, %v2157
  %v2444 = vadd.f32 %v2383, %v2159
  %v2445 = vadd.f32 %v2385, %v2161
  %v2446 = vadd.f32 %v2387, %v2163
  %v2447 = vadd.f32 %v2389, %v2165
  %v2448 = vadd.f32 %v2391, %v2167
  %v2449 = vadd.f32 %v2393, %v2169
  %v2450 = vadd.f32 %v2395, %v2171
  %v2451 = vadd.f32 %v2397, %v2173
  %v2452 = vadd.f32 %v2399, %v2175
  %v2453 = vadd.f32 %v2401, %v2177
  %v2454 = vadd.f32 %v2403, %v2179
  %v2455 = vadd.f32 %v2405, %v2181
  %v2456 = vadd.f32 %v2407, %v2183
  %v2457 = vadd.f32 %v2409, %v2185
  %v2458 = vadd.f32 %v2411, %v2187
  %v2459 = vadd.f32 %v2413, %v2189
  %v2460 = vadd.f32 %v2415, %v2191
  %v2461 = vadd.f32 %v2417, %v2193
  %v2462 = vadd.f32 %v2419, %v2195
  %v2463 = vadd.f32 %v2421, %v2197
  %v2464 = vadd.f32 %v2423, %v2199
  %v2465 = vadd.f32 %v2425, %v2201
  %v2466 = vadd.f32 %v2427, %v2203
  %v2467 = vadd.f32 %v2429, %v2205
  %v2468 = vadd.f32 %v2431, %v2207
  %v2469 = vadd.f32 %v2433, %v2209
  %v2470 = vadd.f32 %v2435, %v2211
  %v2471 = vadd.f32 %v2437, %v2213
  %v2472 = vadd.f32 %v2439, %v2215
  %v2473 = vadd.f32 %v2441, %v2217
  %v2474 = vsub.f32 %v2122, %v2442
  %v2475 = vsub.f32 %v2123, %v2443
  %v2476 = vsub.f32 %v2124, %v2444
  %v2477 = vsub.f32 %v2125, %v2445
  %v2478 = vsub.f32 %v2126, %v2446
  %v2479 = vsub.f32 %v2127, %v2447
  %v2480 = vsub.f32 %v2128, %v2448
  %v2481 = vsub.f32 %v2129, %v2449
  %v2482 = vsub.f32 %v2130, %v2450
  %v2483 = vsub.f32 %v2131, %v2451
  %v2484 = vsub.f32 %v2132, %v2452
  %v2485 = vsub.f32 %v2133, %v2453
  %v2486 = vsub.f32 %v2134, %v2454
  %v2487 = vsub.f32 %v2135, %v2455
  %v2488 = vsub.f32 %v2136, %v2456
  %v2489 = vsub.f32 %v2137, %v2457
  %v2490 = vsub.f32 %v2138, %v2458
  %v2491 = vsub.f32 %v2139, %v2459
  %v2492 = vsub.f32 %v2140, %v2460
  %v2493 = vsub.f32 %v2141, %v2461
  %v2494 = vsub.f32 %v2142, %v2462
  %v2495 = vsub.f32 %v2143, %v2463
  %v2496 = vsub.f32 %v2144, %v2464
  %v2497 = vsub.f32 %v2145, %v2465
  %v2498 = vsub.f32 %v2146, %v2466
  %v2499 = vsub.f32 %v2147, %v2467
  %v2500 = vsub.f32 %v2148, %v2468
  %v2501 = vsub.f32 %v2149, %v2469
  %v2502 = vsub.f32 %v2150, %v2470
  %v2503 = vsub.f32 %v2151, %v2471
  %v2504 = vsub.f32 %v2152, %v2472
  %v2505 = vsub.f32 %v2153, %v2473
  %2506 = vst [vmem:[%s4] sm:$0xff] %v2474
  %2507 = vst [vmem:[%s4 + $0x8] sm:$0xff] %v2475
  %2508 = vst [vmem:[%s4 + $0x10] sm:$0xff] %v2476
  %2509 = vst [vmem:[%s4 + $0x18] sm:$0xff] %v2477
  %2510 = vst [vmem:[%s4 + $0x20] sm:$0xff] %v2478
  %2511 = vst [vmem:[%s4 + $0x28] sm:$0xff] %v2479
  %2512 = vst [vmem:[%s4 + $0x30] sm:$0xff] %v2480
  %2513 = vst [vmem:[%s4 + $0x38] sm:$0xff] %v2481
  %2514 = vst [vmem:[%s4 + $0x40] sm:$0xff] %v2482
  %2515 = vst [vmem:[%s4 + $0x48] sm:$0xff] %v2483
  %2516 = vst [vmem:[%s4 + $0x50] sm:$0xff] %v2484
  %2517 = vst [vmem:[%s4 + $0x58] sm:$0xff] %v2485
  %2518 = vst [vmem:[%s4 + $0x60] sm:$0xff] %v2486
  %2519 = vst [vmem:[%s4 + $0x68] sm:$0xff] %v2487
  %2520 = vst [vmem:[%s4 + $0x70] sm:$0xff] %v2488
  %2521 = vst [vmem:[%s4 + $0x78] sm:$0xff] %v2489
  %2522 = vst [vmem:[%s4 + $0x80] sm:$0xff] %v2490
  %2523 = vst [vmem:[%s4 + $0x88] sm:$0xff] %v2491
  %2524 = vst [vmem:[%s4 + $0x90] sm:$0xff] %v2492
  %2525 = vst [vmem:[%s4 + $0x98] sm:$0xff] %v2493
  %2526 = vst [vmem:[%s4 + $0xa0] sm:$0xff] %v2494
  %2527 = vst [vmem:[%s4 + $0xa8] sm:$0xff] %v2495
  %2528 = vst [vmem:[%s4 + $0xb0] sm:$0xff] %v2496
  %2529 = vst [vmem:[%s4 + $0xb8] sm:$0xff] %v2497
  %2530 = vst [vmem:[%s4 + $0xc0] sm:$0xff] %v2498
  %2531 = vst [vmem:[%s4 + $0xc8] sm:$0xff] %v2499
  %2532 = vst [vmem:[%s4 + $0xd0] sm:$0xff] %v2500
  %2533 = vst [vmem:[%s4 + $0xd8] sm:$0xff] %v2501
  %2534 = vst [vmem:[%s4 + $0xe0] sm:$0xff] %v2502
  %2535 = vst [vmem:[%s4 + $0xe8] sm:$0xff] %v2503
  %2536 = vst [vmem:[%s4 + $0xf0] sm:$0xff] %v2504
  %2537 = vst [vmem:[%s4 + $0xf8] sm:$0xff] %v2505
  // Predicated region
  $region18: #{_forward_impl.1} parent=0 // pred_check
    _
  $region19: #{_forward_impl.1} parent=0 // pred_check_branch
    %2539 = sbr.rel (0) target = $region21
  $region20: #{_forward_impl.1} parent=0 // pred_region
    _
  $region21: #{_forward_impl.1} parent=0 // pred_fallthru
    _
  // Predicated region
  $region22: #{_forward_impl.1} parent=0 // pred_check
    _
  $region23: #{_forward_impl.1} parent=0 // pred_check_branch
    %2541 = sbr.rel (0) target = $region25
  $region24: #{_forward_impl.1} parent=0 // pred_region
    _
  $region25: #{_forward_impl.1} parent=0 // pred_fallthru
    _

</llo_original>
